<compile_context>
chip_gen: v7x
topology: tpu7x:2x2x1
jax: 0.10.0
libtpu: 0.0.40
codegen_flags: <defaults>
</compile_context>

<pallas_src>
import jax
import jax.numpy as jnp
from jax.experimental import pallas as pl
from jax.experimental.pallas import tpu as pltpu


def _round_up(x, m):
    return ((x + m - 1) // m) * m


def _make_kernel(TB, THW, HW, use_abs, no_img_norm, single_k, mask_hw):
    inv_hw = 1.0 / float(HW)

    def epilogue(pooled, wfc_ref, bfc_ref, o_ref):
        # pooled: (TB, F_pad) f32 sum over valid spatial positions.
        feat = pooled * inv_hw                                   # global average pool
        # l2norm over dim=1 (rsqrt -> EUP).  No eps, matching the PyTorch
        # reference; all-zero rows (incl. padded batch rows) give NaN and are
        # sliced off by the wrapper.
        feat = feat * jax.lax.rsqrt(jnp.sum(feat * feat, axis=1, keepdims=True))
        # fc: Linear(F -> E), bf16 MXU inputs, f32 accumulation.
        out = jnp.dot(feat.astype(wfc_ref.dtype), wfc_ref[...],
                      preferred_element_type=jnp.float32)
        out = out + bfc_ref[...]                                 # (TB, E_pad)
        if not no_img_norm:
            out = out * jax.lax.rsqrt(jnp.sum(out * out, axis=1, keepdims=True))
        if use_abs:
            out = jnp.abs(out)
        o_ref[...] = out.astype(o_ref.dtype)

    def pool_partial(h, j):
        # h: (TB*THW, F_pad) f32 post-ReLU activations of one spatial tile.
        hp = h.reshape(TB, THW, -1)
        if mask_hw:
            # Padded spatial rows would contribute relu(bias) != 0; mask them.
            row = jax.lax.broadcasted_iota(jnp.int32, (1, THW, 1), 1)
            hp = jnp.where(j * THW + row < HW, hp, 0.0)
        return jnp.sum(hp, axis=1)                               # (TB, F_pad)

    def update_pool_and_finish(part, j, pool_ref, wfc_ref, bfc_ref, o_ref):
        @pl.when(j == 0)
        def _():
            pool_ref[...] = part

        @pl.when(j != 0)
        def _():
            pool_ref[...] += part

        @pl.when(j == pl.num_programs(1) - 1)
        def _():
            epilogue(pool_ref[...], wfc_ref, bfc_ref, o_ref)

    if single_k:
        # Whole channel contraction in one tile: no (TB*THW, F_pad) accumulator
        # round-trip at all.
        def kernel(x_ref, wc_ref, bc_ref, wfc_ref, bfc_ref, o_ref, pool_ref):
            j = pl.program_id(1)
            x2d = x_ref[...].reshape(TB * THW, x_ref.shape[-1])      # layout-free
            d = jnp.dot(x2d, wc_ref[...], preferred_element_type=jnp.float32)
            h = jnp.maximum(d + bc_ref[...], 0.0)
            update_pool_and_finish(pool_partial(h, j), j,
                                   pool_ref, wfc_ref, bfc_ref, o_ref)
        return kernel

    def kernel(x_ref, wc_ref, bc_ref, wfc_ref, bfc_ref, o_ref, acc_ref, pool_ref):
        j = pl.program_id(1)
        k = pl.program_id(2)
        x2d = x_ref[...].reshape(TB * THW, x_ref.shape[-1])
        d = jnp.dot(x2d, wc_ref[...], preferred_element_type=jnp.float32)

        @pl.when(k == 0)          # '=' instead of zero-init + '+=' saves a store pass
        def _():
            acc_ref[...] = d

        @pl.when(k != 0)
        def _():
            acc_ref[...] += d

        @pl.when(k == pl.num_programs(2) - 1)
        def _():
            h = jnp.maximum(acc_ref[...] + bc_ref[...], 0.0)
            update_pool_and_finish(pool_partial(h, j), j,
                                   pool_ref, wfc_ref, bfc_ref, o_ref)

    return kernel


def encoder_image_full(images, wc, bc, wfc, bfc, *, use_abs=False, no_img_norm=False):
    """images: (B, C, H, W) float32 NCHW.  Returns (B, embed_size) float32."""
    B, C, H, W = images.shape
    HW = H * W
    F = wc.shape[1]          # cnn feature dim (stand-in for 2048)
    E = wfc.shape[1]         # embed_size

    # ---- hardware-aligned sizes -------------------------------------------
    TB = min(_round_up(B, 8), 64)          # batch tile; bigger TB amortizes grid overhead
    B_pad = _round_up(B, TB)
    F_pad = _round_up(F, 128)              # real ResNet dims (2048) are already 256-aligned
    E_pad = _round_up(E, 128)

    # Spatial tile: bounds VMEM regardless of image size; multiple of 16 keeps
    # the in-kernel bf16 (TB, THW, TK) -> (TB*THW, TK) reshape layout-free.
    THW = _round_up(HW, 16) if HW <= 512 else 512
    HW_pad = _round_up(HW, THW)
    nhw = HW_pad // THW
    mask_hw = HW_pad != HW

    # Channel contraction: do NOT pad small C to 128 in HBM (full-dim blocks are
    # exempt from the 128-lane rule) -- only pad to the bf16 sublane tile.
    if C <= 128:
        C_store = _round_up(C, 16)
        TK, nk = C_store, 1
    else:
        C_store = _round_up(C, 128)
        if C_store * F_pad * 2 <= (8 << 20):       # wc fits resident in VMEM
            TK, nk = C_store, 1
        else:
            TK = 256 if C_store % 256 == 0 else 128
            nk = C_store // TK
    single_k = nk == 1

    # ---- wrapper-side layout prep -------------------------------------------
    # Cast to bf16 BEFORE the transpose to halve the bytes this copy moves.
    # TODO(synk): accepting NHWC input upstream would remove this transpose copy.
    x = jnp.transpose(images.astype(jnp.bfloat16), (0, 2, 3, 1)).reshape(B, HW, C)
    x = jnp.pad(x, ((0, B_pad - B), (0, HW_pad - HW), (0, C_store - C)))

    wc_p = jnp.pad(wc, ((0, C_store - C), (0, F_pad - F))).astype(jnp.bfloat16)
    bc_p = jnp.pad(bc, ((0, F_pad - F),)).reshape(1, F_pad).astype(jnp.float32)
    wfc_p = jnp.pad(wfc, ((0, F_pad - F), (0, E_pad - E))).astype(jnp.bfloat16)
    bfc_p = jnp.pad(bfc, ((0, E_pad - E),)).reshape(1, E_pad).astype(jnp.float32)

    # ---- grid / specs --------------------------------------------------------
    if single_k:
        grid = (B_pad // TB, nhw)
        in_specs = [
            pl.BlockSpec((TB, THW, TK), lambda i, j: (i, j, 0)),
            pl.BlockSpec((TK, F_pad), lambda i, j: (0, 0)),       # resident
            pl.BlockSpec((1, F_pad), lambda i, j: (0, 0)),        # resident
            pl.BlockSpec((F_pad, E_pad), lambda i, j: (0, 0)),    # resident
            pl.BlockSpec((1, E_pad), lambda i, j: (0, 0)),        # resident
        ]
        out_specs = pl.BlockSpec((TB, E_pad), lambda i, j: (i, 0))
        scratch = [pltpu.VMEM((TB, F_pad), jnp.float32)]          # pooled partial sums
        dims = ("parallel", "arbitrary")
    else:
        grid = (B_pad // TB, nhw, nk)                             # reduction axis innermost
        in_specs = [
            pl.BlockSpec((TB, THW, TK), lambda i, j, k: (i, j, k)),
            pl.BlockSpec((TK, F_pad), lambda i, j, k: (k, 0)),
            pl.BlockSpec((1, F_pad), lambda i, j, k: (0, 0)),
            pl.BlockSpec((F_pad, E_pad), lambda i, j, k: (0, 0)),
            pl.BlockSpec((1, E_pad), lambda i, j, k: (0, 0)),
        ]
        out_specs = pl.BlockSpec((TB, E_pad), lambda i, j, k: (i, 0))
        scratch = [pltpu.VMEM((TB * THW, F_pad), jnp.float32),    # K-contraction acc
                   pltpu.VMEM((TB, F_pad), jnp.float32)]          # pooled partial sums
        dims = ("parallel", "arbitrary", "arbitrary")

    # ---- VMEM budget + cost hint ---------------------------------------------
    vmem_est = (2 * TB * THW * TK * 2                 # x tile, double-buffered, bf16
                + 2 * TK * F_pad * 2                  # wc
                + 2 * F_pad * E_pad * 2               # wfc
                + 2 * (F_pad + E_pad) * 4             # biases
                + 2 * TB * E_pad * 4                  # out
                + (0 if single_k else TB * THW * F_pad * 4)
                + TB * F_pad * 4)
    cp_kwargs = {"dimension_semantics": dims}
    if vmem_est > (12 << 20):
        # Raise scoped VMEM only when needed; stay below v7x's 64 MiB physical.
        cp_kwargs["vmem_limit_bytes"] = int(min(max(2 * vmem_est, 32 << 20), 60 << 20))

    cost = pl.CostEstimate(
        flops=2 * B * HW * C * F + 2 * B * F * E,
        transcendentals=2 * B,
        bytes_accessed=int(x.size * 2 + wc_p.size * 2 + wfc_p.size * 2
                           + bc_p.size * 4 + bfc_p.size * 4 + B_pad * E_pad * 4),
    )

    out = pl.pallas_call(
        _make_kernel(TB, THW, HW, use_abs, no_img_norm, single_k, mask_hw),
        out_shape=jax.ShapeDtypeStruct((B_pad, E_pad), jnp.float32),
        grid=grid,
        in_specs=in_specs,
        out_specs=out_specs,
        scratch_shapes=scratch,
        compiler_params=pltpu.CompilerParams(**cp_kwargs),
        cost_estimate=cost,
    )(x, wc_p, bc_p, wfc_p, bfc_p)

    return out[:B, :E]


def make_params(key, C, F, E):
    """Deterministic parameter init (shapes implied by the module __init__)."""
    k1, k2 = jax.random.split(key, 2)
    # Stand-in CNN pointwise conv weights.
    wc = jax.random.normal(k1, (C, F), dtype=jnp.float32) * 0.1
    bc = jnp.zeros((F,), dtype=jnp.float32)
    # fc: Xavier-uniform weight, zero bias (matches init_weights()).
    r = jnp.sqrt(6.0) / jnp.sqrt(float(F + E))
    wfc = jax.random.uniform(k2, (F, E), minval=-r, maxval=r, dtype=jnp.float32)
    bfc = jnp.zeros((E,), dtype=jnp.float32)
    return wc, bc, wfc, bfc


def _reference(images, wc, bc, wfc, bfc, use_abs, no_img_norm):
    """Pure-JAX f32 reference of the same forward pass (stand-in CNN included)."""
    B, C, H, W = images.shape
    x = jnp.transpose(images, (0, 2, 3, 1)).reshape(B, H * W, C)
    h = jnp.maximum(jnp.einsum("bsc,cf->bsf", x, wc) + bc, 0.0)
    feat = jnp.mean(h, axis=1)
    feat = feat / jnp.sqrt(jnp.sum(feat * feat, axis=1, keepdims=True))
    out = feat @ wfc + bfc
    if not no_img_norm:
        out = out / jnp.sqrt(jnp.sum(out * out, axis=1, keepdims=True))
    if use_abs:
        out = jnp.abs(out)
    return out


if __name__ == "__main__":
    key = jax.random.PRNGKey(0)
    k_img, k_par = jax.random.split(key)

    B, C, H, W = 2, 4, 16, 16      # NCHW images
    F, E = 64, 32                  # stand-in cnn feature dim, embed_size

    images = jax.random.normal(k_img, (B, C, H, W), dtype=jnp.float32)
    wc, bc, wfc, bfc = make_params(k_par, C, F, E)

    out = encoder_image_full(images, wc, bc, wfc, bfc,
                             use_abs=False, no_img_norm=False)
    out = jax.block_until_ready(out)

    assert out.shape == (B, E)
    # Rows must be unit-norm because of the final l2norm (computed in f32).
    norms = jnp.sqrt(jnp.sum(out * out, axis=1))
    assert bool(jnp.all(jnp.abs(norms - 1.0) < 1e-3)), "unit-norm check failed"
    # Loose match vs a pure-f32 reference (kernel uses bf16 MXU inputs).
    ref = _reference(images, wc, bc, wfc, bfc, use_abs=False, no_img_norm=False)
    assert bool(jnp.all(jnp.abs(out - ref) < 3e-2)), "reference mismatch"
    print("KERNEL_OK")
</pallas_src>

<mosaic_0001>
module attributes {stable_mosaic.version = 11 : i64} {
  func.func @kernel(%arg0: i32, %arg1: i32, %arg2: memref<8x256x16xbf16, #tpu.memory_space<vmem>>, %arg3: memref<16x128xbf16, #tpu.memory_space<vmem>>, %arg4: memref<1x128xf32, #tpu.memory_space<vmem>>, %arg5: memref<128x128xbf16, #tpu.memory_space<vmem>>, %arg6: memref<1x128xf32, #tpu.memory_space<vmem>>, %arg7: memref<8x128xf32, #tpu.memory_space<vmem>>, %arg8: memref<8x128xf32, #tpu.memory_space<vmem>>) attributes {dimension_semantics = [#tpu.dimension_semantics<parallel>, #tpu.dimension_semantics<arbitrary>], iteration_bounds = array<i64: 1, 1>, scalar_prefetch = 0 : i64, scratch_operands = 1 : i64, tpu.core_type = #tpu.core_type<tc>, window_params = [{transform_indices = @transform_0, window_bounds = array<i64: 8, 256, 16>}, {pipeline_mode = #tpu.pipeline_mode<synchronous>, transform_indices = @transform_1, window_bounds = array<i64: 16, 128>}, {pipeline_mode = #tpu.pipeline_mode<synchronous>, transform_indices = @transform_2, window_bounds = array<i64: 1, 128>}, {pipeline_mode = #tpu.pipeline_mode<synchronous>, transform_indices = @transform_3, window_bounds = array<i64: 128, 128>}, {pipeline_mode = #tpu.pipeline_mode<synchronous>, transform_indices = @transform_4, window_bounds = array<i64: 1, 128>}, {transform_indices = @transform_5, window_bounds = array<i64: 8, 128>}]} {
    %c0 = arith.constant 0 : index
    %c0_0 = arith.constant 0 : index
    %c0_1 = arith.constant 0 : index
    %0 = vector.load %arg2[%c0, %c0_0, %c0_1] : memref<8x256x16xbf16, #tpu.memory_space<vmem>>, vector<8x256x16xbf16>
    %1 = vector.shape_cast %0 : vector<8x256x16xbf16> to vector<2048x16xbf16>
    %c0_2 = arith.constant 0 : index
    %c0_3 = arith.constant 0 : index
    %2 = vector.load %arg3[%c0_2, %c0_3] : memref<16x128xbf16, #tpu.memory_space<vmem>>, vector<16x128xbf16>
    %cst = arith.constant dense<0.000000e+00> : vector<2048x128xf32>
    %3 = tpu.matmul %1, %2, %cst {dimension_numbers = #tpu.dot_dimension_numbers<[1], [0], [0], [1], [0, 0, 1, 1], [], []>} : vector<2048x16xbf16>, vector<16x128xbf16>, vector<2048x128xf32> -> vector<2048x128xf32>
    %c0_4 = arith.constant 0 : index
    %c0_5 = arith.constant 0 : index
    %4 = vector.load %arg4[%c0_4, %c0_5] : memref<1x128xf32, #tpu.memory_space<vmem>>, vector<1x128xf32>
    %5 = vector.broadcast %4 : vector<1x128xf32> to vector<2048x128xf32>
    %6 = arith.addf %3, %5 : vector<2048x128xf32>
    %cst_6 = arith.constant 0.000000e+00 : f32
    %7 = vector.broadcast %cst_6 : f32 to vector<2048x128xf32>
    %8 = arith.maximumf %6, %7 : vector<2048x128xf32>
    %9 = vector.shape_cast %8 : vector<2048x128xf32> to vector<8x256x128xf32>
    %cst_7 = arith.constant dense<0.000000e+00> : vector<8x128xf32>
    %10 = vector.multi_reduction <add>, %9, %cst_7 [1] : vector<8x256x128xf32> to vector<8x128xf32>
    %c0_i32 = arith.constant 0 : i32
    %11 = arith.cmpi eq, %arg1, %c0_i32 : i32
    %12 = arith.extui %11 : i1 to i32
    %c0_i32_8 = arith.constant 0 : i32
    %13 = arith.cmpi ne, %12, %c0_i32_8 : i32
    scf.if %13 {
      %c0_13 = arith.constant 0 : index
      %c0_14 = arith.constant 0 : index
      %20 = vector.load %arg8[%c0_13, %c0_14] : memref<8x128xf32, #tpu.memory_space<vmem>>, vector<8x128xf32>
      tpu.vector_store %arg8[%c0_13, %c0_14], %10 {strides = array<i32>} : memref<8x128xf32, #tpu.memory_space<vmem>>, vector<8x128xf32>,
    } else {
    }
    %c0_i32_9 = arith.constant 0 : i32
    %14 = arith.cmpi ne, %arg1, %c0_i32_9 : i32
    %15 = arith.extui %14 : i1 to i32
    %c0_i32_10 = arith.constant 0 : i32
    %16 = arith.cmpi ne, %15, %c0_i32_10 : i32
    scf.if %16 {
      %c0_13 = arith.constant 0 : index
      %c0_14 = arith.constant 0 : index
      %20 = vector.load %arg8[%c0_13, %c0_14] : memref<8x128xf32, #tpu.memory_space<vmem>>, vector<8x128xf32>
      %21 = arith.addf %20, %10 : vector<8x128xf32>
      %c0_15 = arith.constant 0 : index
      %c0_16 = arith.constant 0 : index
      %22 = vector.load %arg8[%c0_15, %c0_16] : memref<8x128xf32, #tpu.memory_space<vmem>>, vector<8x128xf32>
      tpu.vector_store %arg8[%c0_15, %c0_16], %21 {strides = array<i32>} : memref<8x128xf32, #tpu.memory_space<vmem>>, vector<8x128xf32>,
    } else {
    }
    %c0_i32_11 = arith.constant 0 : i32
    %17 = arith.cmpi eq, %arg1, %c0_i32_11 : i32
    %18 = arith.extui %17 : i1 to i32
    %c0_i32_12 = arith.constant 0 : i32
    %19 = arith.cmpi ne, %18, %c0_i32_12 : i32
    scf.if %19 {
      %c0_13 = arith.constant 0 : index
      %c0_14 = arith.constant 0 : index
      %20 = vector.load %arg8[%c0_13, %c0_14] : memref<8x128xf32, #tpu.memory_space<vmem>>, vector<8x128xf32>
      %cst_15 = arith.constant 3.906250e-03 : f32
      %21 = vector.broadcast %cst_15 : f32 to vector<8x128xf32>
      %22 = arith.mulf %20, %21 : vector<8x128xf32>
      %23 = arith.mulf %22, %22 : vector<8x128xf32>
      %cst_16 = arith.constant dense<0.000000e+00> : vector<8xf32>
      %24 = vector.multi_reduction <add>, %23, %cst_16 [1] : vector<8x128xf32> to vector<8xf32>
      %25 = vector.shape_cast %24 : vector<8xf32> to vector<8x1xf32>
      %26 = math.rsqrt %25 : vector<8x1xf32>
      %27 = vector.broadcast %26 : vector<8x1xf32> to vector<8x128xf32>
      %28 = arith.mulf %22, %27 : vector<8x128xf32>
      %29 = arith.truncf %28 : vector<8x128xf32> to vector<8x128xbf16>
      %c0_17 = arith.constant 0 : index
      %c0_18 = arith.constant 0 : index
      %30 = vector.load %arg5[%c0_17, %c0_18] : memref<128x128xbf16, #tpu.memory_space<vmem>>, vector<128x128xbf16>
      %cst_19 = arith.constant dense<0.000000e+00> : vector<8x128xf32>
      %31 = tpu.matmul %29, %30, %cst_19 {dimension_numbers = #tpu.dot_dimension_numbers<[1], [0], [0], [1], [0, 0, 1, 1], [], []>} : vector<8x128xbf16>, vector<128x128xbf16>, vector<8x128xf32> -> vector<8x128xf32>
      %c0_20 = arith.constant 0 : index
      %c0_21 = arith.constant 0 : index
      %32 = vector.load %arg6[%c0_20, %c0_21] : memref<1x128xf32, #tpu.memory_space<vmem>>, vector<1x128xf32>
      %33 = vector.broadcast %32 : vector<1x128xf32> to vector<8x128xf32>
      %34 = arith.addf %31, %33 : vector<8x128xf32>
      %35 = arith.mulf %34, %34 : vector<8x128xf32>
      %cst_22 = arith.constant dense<0.000000e+00> : vector<8xf32>
      %36 = vector.multi_reduction <add>, %35, %cst_22 [1] : vector<8x128xf32> to vector<8xf32>
      %37 = vector.shape_cast %36 : vector<8xf32> to vector<8x1xf32>
      %38 = math.rsqrt %37 : vector<8x1xf32>
      %39 = vector.broadcast %38 : vector<8x1xf32> to vector<8x128xf32>
      %40 = arith.mulf %34, %39 : vector<8x128xf32>
      %c0_23 = arith.constant 0 : index
      %c0_24 = arith.constant 0 : index
      %41 = vector.load %arg7[%c0_23, %c0_24] : memref<8x128xf32, #tpu.memory_space<vmem>>, vector<8x128xf32>
      tpu.vector_store %arg7[%c0_23, %c0_24], %40 {strides = array<i32>} : memref<8x128xf32, #tpu.memory_space<vmem>>, vector<8x128xf32>,
    } else {
    }
    return
  }
  func.func @transform_0(%arg0: i32, %arg1: i32) -> (i32, i32, i32) {
    %c0_i32 = arith.constant 0 : i32
    %c0_i32_0 = arith.constant 0 : i32
    return %arg0, %arg1, %c0_i32 : i32, i32, i32
  }
  func.func @transform_1(%arg0: i32, %arg1: i32) -> (i32, i32) {
    %c0_i32 = arith.constant 0 : i32
    %c0_i32_0 = arith.constant 0 : i32
    %c0_i32_1 = arith.constant 0 : i32
    return %c0_i32, %c0_i32_0 : i32, i32
  }
  func.func @transform_2(%arg0: i32, %arg1: i32) -> (i32, i32) {
    %c0_i32 = arith.constant 0 : i32
    %c0_i32_0 = arith.constant 0 : i32
    %c0_i32_1 = arith.constant 0 : i32
    return %c0_i32, %c0_i32_0 : i32, i32
  }
  func.func @transform_3(%arg0: i32, %arg1: i32) -> (i32, i32) {
    %c0_i32 = arith.constant 0 : i32
    %c0_i32_0 = arith.constant 0 : i32
    %c0_i32_1 = arith.constant 0 : i32
    return %c0_i32, %c0_i32_0 : i32, i32
  }
  func.func @transform_4(%arg0: i32, %arg1: i32) -> (i32, i32) {
    %c0_i32 = arith.constant 0 : i32
    %c0_i32_0 = arith.constant 0 : i32
    %c0_i32_1 = arith.constant 0 : i32
    return %c0_i32, %c0_i32_0 : i32, i32
  }
  func.func @transform_5(%arg0: i32, %arg1: i32) -> (i32, i32) {
    %c0_i32 = arith.constant 0 : i32
    %c0_i32_0 = arith.constant 0 : i32
    return %arg0, %c0_i32 : i32, i32
  }
}

</mosaic_0001>

<llo_original>
// kernel: tpu_custom_call.1
$region0: #{tpu_custom_call.1}
  #allocation0 [shape = 'u32[]', space=smem, size = 0x4, offset = 0x4, fixed_abs, tag = 'smem constant byte address 0x4 - core index']
  #allocation1 [shape = 'u32[144,128]{1,0:T(1,128)}', space=vmem, size = 0x12000, scoped, tag = 'internal scratch']
  #allocation2 [shape = 'f32[8,128]{1,0:T(8,128)}', space=vmem, size = 0x1000, scoped, tag = 'scratch operand']
  %s0 = inlined_call_operand.vmem [shape: bf16[8,256,16], index: 0, kind: input, shape index: {}]
  %s1 = inlined_call_operand.vmem [shape: bf16[16,128], index: 1, kind: input, shape index: {}]
  %s2 = inlined_call_operand.vmem [shape: f32[1,128], index: 2, kind: input, shape index: {}]
  %s3 = inlined_call_operand.vmem [shape: bf16[128,128], index: 3, kind: input, shape index: {}]
  %s4 = inlined_call_operand.vmem [shape: f32[1,128], index: 4, kind: input, shape index: {}]
  %s5 = inlined_call_operand.hbm [shape: f32[8,128], index: 5, kind: output, shape index: {}]
  %s6 = sld [smem:[#allocation0]]
  $region42: #{tpu_custom_call.1} parent=0
    _
  %s8 = ssub.s32 1, %s6
  %s9 = scalar_select 0, %s8, %s6
  $region1: #{tpu_custom_call.1} parent=0
    #allocation3 [shape = 'u8[4096]{0}', space=vmem, size = 0x1000, scoped, tag = 'output window, operand 0, single buffered']
    #allocation4 [shape = 's32[1]{0}', space=sflag, size = 0x4, scoped, tag = 'scoped memory for tpu_custom_call.1']
    %10 = vsyncpa [#allocation4], 0
    // Predicated region
    $region2: #{tpu_custom_call.1} parent=1 // pred_check
      _
    $region3: #{tpu_custom_call.1} parent=1 // pred_check_branch
      %12 = sbr.rel (0) target = $region5
    $region4: #{tpu_custom_call.1} parent=1 // pred_region
      _
    $region5: #{tpu_custom_call.1} parent=1 // pred_fallthru
      _
    // Predicated region
    $region6: #{tpu_custom_call.1} parent=1 // pred_check
      _
    $region7: #{tpu_custom_call.1} parent=1 // pred_check_branch
      %14 = sbr.rel (0) target = $region9
    $region8: #{tpu_custom_call.1} parent=1 // pred_region
      _
    $region9: #{tpu_custom_call.1} parent=1 // pred_fallthru
      _
    // Predicated region
    $region10: #{tpu_custom_call.1} parent=1 // pred_check
      _
    $region11: #{tpu_custom_call.1} parent=1 // pred_check_branch
      %16 = sbr.rel (0) target = $region13
    $region12: #{tpu_custom_call.1} parent=1 // pred_region
      _
    $region13: #{tpu_custom_call.1} parent=1 // pred_fallthru
      _
    // Predicated region
    $region14: #{tpu_custom_call.1} parent=1 // pred_check
      _
    $region15: #{tpu_custom_call.1} parent=1 // pred_check_branch
      %18 = sbr.rel (0) target = $region17
    $region16: #{tpu_custom_call.1} parent=1 // pred_region
      _
    $region17: #{tpu_custom_call.1} parent=1 // pred_fallthru
      _
    // Predicated region
    $region18: #{tpu_custom_call.1} parent=1 // pred_check
      _
    $region19: #{tpu_custom_call.1} parent=1 // pred_check_branch
      %20 = sbr.rel (0) target = $region21
    $region20: #{tpu_custom_call.1} parent=1 // pred_region
      _
    $region21: #{tpu_custom_call.1} parent=1 // pred_fallthru
      _
    %v22 = vld [vmem:[%s0] sm:$0xf]
    %v23 = vld [vmem:[%s0 + $0x4] sm:$0xf]
    %v24 = vld [vmem:[%s0 + $0x8] sm:$0xf]
    %v25 = vld [vmem:[%s0 + $0xc] sm:$0xf]
    %v26 = vld [vmem:[%s0 + $0x10] sm:$0xf]
    %v27 = vld [vmem:[%s0 + $0x14] sm:$0xf]
    %v28 = vld [vmem:[%s0 + $0x18] sm:$0xf]
    %v29 = vld [vmem:[%s0 + $0x1c] sm:$0xf]
    %v30 = vld [vmem:[%s0 + $0x20] sm:$0xf]
    %v31 = vld [vmem:[%s0 + $0x24] sm:$0xf]
    %v32 = vld [vmem:[%s0 + $0x28] sm:$0xf]
    %v33 = vld [vmem:[%s0 + $0x2c] sm:$0xf]
    %v34 = vld [vmem:[%s0 + $0x30] sm:$0xf]
    %v35 = vld [vmem:[%s0 + $0x34] sm:$0xf]
    %v36 = vld [vmem:[%s0 + $0x38] sm:$0xf]
    %v37 = vld [vmem:[%s0 + $0x3c] sm:$0xf]
    %v38 = vld [vmem:[%s0 + $0x40] sm:$0xf]
    %v39 = vld [vmem:[%s0 + $0x44] sm:$0xf]
    %v40 = vld [vmem:[%s0 + $0x48] sm:$0xf]
    %v41 = vld [vmem:[%s0 + $0x4c] sm:$0xf]
    %v42 = vld [vmem:[%s0 + $0x50] sm:$0xf]
    %v43 = vld [vmem:[%s0 + $0x54] sm:$0xf]
    %v44 = vld [vmem:[%s0 + $0x58] sm:$0xf]
    %v45 = vld [vmem:[%s0 + $0x5c] sm:$0xf]
    %v46 = vld [vmem:[%s0 + $0x60] sm:$0xf]
    %v47 = vld [vmem:[%s0 + $0x64] sm:$0xf]
    %v48 = vld [vmem:[%s0 + $0x68] sm:$0xf]
    %v49 = vld [vmem:[%s0 + $0x6c] sm:$0xf]
    %v50 = vld [vmem:[%s0 + $0x70] sm:$0xf]
    %v51 = vld [vmem:[%s0 + $0x74] sm:$0xf]
    %v52 = vld [vmem:[%s0 + $0x78] sm:$0xf]
    %v53 = vld [vmem:[%s0 + $0x7c] sm:$0xf]
    %v54 = vld [vmem:[%s0 + $0x80] sm:$0xf]
    %v55 = vld [vmem:[%s0 + $0x84] sm:$0xf]
    %v56 = vld [vmem:[%s0 + $0x88] sm:$0xf]
    %v57 = vld [vmem:[%s0 + $0x8c] sm:$0xf]
    %v58 = vld [vmem:[%s0 + $0x90] sm:$0xf]
    %v59 = vld [vmem:[%s0 + $0x94] sm:$0xf]
    %v60 = vld [vmem:[%s0 + $0x98] sm:$0xf]
    %v61 = vld [vmem:[%s0 + $0x9c] sm:$0xf]
    %v62 = vld [vmem:[%s0 + $0xa0] sm:$0xf]
    %v63 = vld [vmem:[%s0 + $0xa4] sm:$0xf]
    %v64 = vld [vmem:[%s0 + $0xa8] sm:$0xf]
    %v65 = vld [vmem:[%s0 + $0xac] sm:$0xf]
    %v66 = vld [vmem:[%s0 + $0xb0] sm:$0xf]
    %v67 = vld [vmem:[%s0 + $0xb4] sm:$0xf]
    %v68 = vld [vmem:[%s0 + $0xb8] sm:$0xf]
    %v69 = vld [vmem:[%s0 + $0xbc] sm:$0xf]
    %v70 = vld [vmem:[%s0 + $0xc0] sm:$0xf]
    %v71 = vld [vmem:[%s0 + $0xc4] sm:$0xf]
    %v72 = vld [vmem:[%s0 + $0xc8] sm:$0xf]
    %v73 = vld [vmem:[%s0 + $0xcc] sm:$0xf]
    %v74 = vld [vmem:[%s0 + $0xd0] sm:$0xf]
    %v75 = vld [vmem:[%s0 + $0xd4] sm:$0xf]
    %v76 = vld [vmem:[%s0 + $0xd8] sm:$0xf]
    %v77 = vld [vmem:[%s0 + $0xdc] sm:$0xf]
    %v78 = vld [vmem:[%s0 + $0xe0] sm:$0xf]
    %v79 = vld [vmem:[%s0 + $0xe4] sm:$0xf]
    %v80 = vld [vmem:[%s0 + $0xe8] sm:$0xf]
    %v81 = vld [vmem:[%s0 + $0xec] sm:$0xf]
    %v82 = vld [vmem:[%s0 + $0xf0] sm:$0xf]
    %v83 = vld [vmem:[%s0 + $0xf4] sm:$0xf]
    %v84 = vld [vmem:[%s0 + $0xf8] sm:$0xf]
    %v85 = vld [vmem:[%s0 + $0xfc] sm:$0xf]
    %v86 = vld [vmem:[%s0 + $0x100] sm:$0xf]
    %v87 = vld [vmem:[%s0 + $0x104] sm:$0xf]
    %v88 = vld [vmem:[%s0 + $0x108] sm:$0xf]
    %v89 = vld [vmem:[%s0 + $0x10c] sm:$0xf]
    %v90 = vld [vmem:[%s0 + $0x110] sm:$0xf]
    %v91 = vld [vmem:[%s0 + $0x114] sm:$0xf]
    %v92 = vld [vmem:[%s0 + $0x118] sm:$0xf]
    %v93 = vld [vmem:[%s0 + $0x11c] sm:$0xf]
    %v94 = vld [vmem:[%s0 + $0x120] sm:$0xf]
    %v95 = vld [vmem:[%s0 + $0x124] sm:$0xf]
    %v96 = vld [vmem:[%s0 + $0x128] sm:$0xf]
    %v97 = vld [vmem:[%s0 + $0x12c] sm:$0xf]
    %v98 = vld [vmem:[%s0 + $0x130] sm:$0xf]
    %v99 = vld [vmem:[%s0 + $0x134] sm:$0xf]
    %v100 = vld [vmem:[%s0 + $0x138] sm:$0xf]
    %v101 = vld [vmem:[%s0 + $0x13c] sm:$0xf]
    %v102 = vld [vmem:[%s0 + $0x140] sm:$0xf]
    %v103 = vld [vmem:[%s0 + $0x144] sm:$0xf]
    %v104 = vld [vmem:[%s0 + $0x148] sm:$0xf]
    %v105 = vld [vmem:[%s0 + $0x14c] sm:$0xf]
    %v106 = vld [vmem:[%s0 + $0x150] sm:$0xf]
    %v107 = vld [vmem:[%s0 + $0x154] sm:$0xf]
    %v108 = vld [vmem:[%s0 + $0x158] sm:$0xf]
    %v109 = vld [vmem:[%s0 + $0x15c] sm:$0xf]
    %v110 = vld [vmem:[%s0 + $0x160] sm:$0xf]
    %v111 = vld [vmem:[%s0 + $0x164] sm:$0xf]
    %v112 = vld [vmem:[%s0 + $0x168] sm:$0xf]
    %v113 = vld [vmem:[%s0 + $0x16c] sm:$0xf]
    %v114 = vld [vmem:[%s0 + $0x170] sm:$0xf]
    %v115 = vld [vmem:[%s0 + $0x174] sm:$0xf]
    %v116 = vld [vmem:[%s0 + $0x178] sm:$0xf]
    %v117 = vld [vmem:[%s0 + $0x17c] sm:$0xf]
    %v118 = vld [vmem:[%s0 + $0x180] sm:$0xf]
    %v119 = vld [vmem:[%s0 + $0x184] sm:$0xf]
    %v120 = vld [vmem:[%s0 + $0x188] sm:$0xf]
    %v121 = vld [vmem:[%s0 + $0x18c] sm:$0xf]
    %v122 = vld [vmem:[%s0 + $0x190] sm:$0xf]
    %v123 = vld [vmem:[%s0 + $0x194] sm:$0xf]
    %v124 = vld [vmem:[%s0 + $0x198] sm:$0xf]
    %v125 = vld [vmem:[%s0 + $0x19c] sm:$0xf]
    %v126 = vld [vmem:[%s0 + $0x1a0] sm:$0xf]
    %v127 = vld [vmem:[%s0 + $0x1a4] sm:$0xf]
    %v128 = vld [vmem:[%s0 + $0x1a8] sm:$0xf]
    %v129 = vld [vmem:[%s0 + $0x1ac] sm:$0xf]
    %v130 = vld [vmem:[%s0 + $0x1b0] sm:$0xf]
    %v131 = vld [vmem:[%s0 + $0x1b4] sm:$0xf]
    %v132 = vld [vmem:[%s0 + $0x1b8] sm:$0xf]
    %v133 = vld [vmem:[%s0 + $0x1bc] sm:$0xf]
    %v134 = vld [vmem:[%s0 + $0x1c0] sm:$0xf]
    %v135 = vld [vmem:[%s0 + $0x1c4] sm:$0xf]
    %v136 = vld [vmem:[%s0 + $0x1c8] sm:$0xf]
    %v137 = vld [vmem:[%s0 + $0x1cc] sm:$0xf]
    %v138 = vld [vmem:[%s0 + $0x1d0] sm:$0xf]
    %v139 = vld [vmem:[%s0 + $0x1d4] sm:$0xf]
    %v140 = vld [vmem:[%s0 + $0x1d8] sm:$0xf]
    %v141 = vld [vmem:[%s0 + $0x1dc] sm:$0xf]
    %v142 = vld [vmem:[%s0 + $0x1e0] sm:$0xf]
    %v143 = vld [vmem:[%s0 + $0x1e4] sm:$0xf]
    %v144 = vld [vmem:[%s0 + $0x1e8] sm:$0xf]
    %v145 = vld [vmem:[%s0 + $0x1ec] sm:$0xf]
    %v146 = vld [vmem:[%s0 + $0x1f0] sm:$0xf]
    %v147 = vld [vmem:[%s0 + $0x1f4] sm:$0xf]
    %v148 = vld [vmem:[%s0 + $0x1f8] sm:$0xf]
    %v149 = vld [vmem:[%s0 + $0x1fc] sm:$0xf]
    %v150 = vld [vmem:[%s0 + $0x200] sm:$0xf]
    %v151 = vld [vmem:[%s0 + $0x204] sm:$0xf]
    %v152 = vld [vmem:[%s0 + $0x208] sm:$0xf]
    %v153 = vld [vmem:[%s0 + $0x20c] sm:$0xf]
    %v154 = vld [vmem:[%s0 + $0x210] sm:$0xf]
    %v155 = vld [vmem:[%s0 + $0x214] sm:$0xf]
    %v156 = vld [vmem:[%s0 + $0x218] sm:$0xf]
    %v157 = vld [vmem:[%s0 + $0x21c] sm:$0xf]
    %v158 = vld [vmem:[%s0 + $0x220] sm:$0xf]
    %v159 = vld [vmem:[%s0 + $0x224] sm:$0xf]
    %v160 = vld [vmem:[%s0 + $0x228] sm:$0xf]
    %v161 = vld [vmem:[%s0 + $0x22c] sm:$0xf]
    %v162 = vld [vmem:[%s0 + $0x230] sm:$0xf]
    %v163 = vld [vmem:[%s0 + $0x234] sm:$0xf]
    %v164 = vld [vmem:[%s0 + $0x238] sm:$0xf]
    %v165 = vld [vmem:[%s0 + $0x23c] sm:$0xf]
    %v166 = vld [vmem:[%s0 + $0x240] sm:$0xf]
    %v167 = vld [vmem:[%s0 + $0x244] sm:$0xf]
    %v168 = vld [vmem:[%s0 + $0x248] sm:$0xf]
    %v169 = vld [vmem:[%s0 + $0x24c] sm:$0xf]
    %v170 = vld [vmem:[%s0 + $0x250] sm:$0xf]
    %v171 = vld [vmem:[%s0 + $0x254] sm:$0xf]
    %v172 = vld [vmem:[%s0 + $0x258] sm:$0xf]
    %v173 = vld [vmem:[%s0 + $0x25c] sm:$0xf]
    %v174 = vld [vmem:[%s0 + $0x260] sm:$0xf]
    %v175 = vld [vmem:[%s0 + $0x264] sm:$0xf]
    %v176 = vld [vmem:[%s0 + $0x268] sm:$0xf]
    %v177 = vld [vmem:[%s0 + $0x26c] sm:$0xf]
    %v178 = vld [vmem:[%s0 + $0x270] sm:$0xf]
    %v179 = vld [vmem:[%s0 + $0x274] sm:$0xf]
    %v180 = vld [vmem:[%s0 + $0x278] sm:$0xf]
    %v181 = vld [vmem:[%s0 + $0x27c] sm:$0xf]
    %v182 = vld [vmem:[%s0 + $0x280] sm:$0xf]
    %v183 = vld [vmem:[%s0 + $0x284] sm:$0xf]
    %v184 = vld [vmem:[%s0 + $0x288] sm:$0xf]
    %v185 = vld [vmem:[%s0 + $0x28c] sm:$0xf]
    %v186 = vld [vmem:[%s0 + $0x290] sm:$0xf]
    %v187 = vld [vmem:[%s0 + $0x294] sm:$0xf]
    %v188 = vld [vmem:[%s0 + $0x298] sm:$0xf]
    %v189 = vld [vmem:[%s0 + $0x29c] sm:$0xf]
    %v190 = vld [vmem:[%s0 + $0x2a0] sm:$0xf]
    %v191 = vld [vmem:[%s0 + $0x2a4] sm:$0xf]
    %v192 = vld [vmem:[%s0 + $0x2a8] sm:$0xf]
    %v193 = vld [vmem:[%s0 + $0x2ac] sm:$0xf]
    %v194 = vld [vmem:[%s0 + $0x2b0] sm:$0xf]
    %v195 = vld [vmem:[%s0 + $0x2b4] sm:$0xf]
    %v196 = vld [vmem:[%s0 + $0x2b8] sm:$0xf]
    %v197 = vld [vmem:[%s0 + $0x2bc] sm:$0xf]
    %v198 = vld [vmem:[%s0 + $0x2c0] sm:$0xf]
    %v199 = vld [vmem:[%s0 + $0x2c4] sm:$0xf]
    %v200 = vld [vmem:[%s0 + $0x2c8] sm:$0xf]
    %v201 = vld [vmem:[%s0 + $0x2cc] sm:$0xf]
    %v202 = vld [vmem:[%s0 + $0x2d0] sm:$0xf]
    %v203 = vld [vmem:[%s0 + $0x2d4] sm:$0xf]
    %v204 = vld [vmem:[%s0 + $0x2d8] sm:$0xf]
    %v205 = vld [vmem:[%s0 + $0x2dc] sm:$0xf]
    %v206 = vld [vmem:[%s0 + $0x2e0] sm:$0xf]
    %v207 = vld [vmem:[%s0 + $0x2e4] sm:$0xf]
    %v208 = vld [vmem:[%s0 + $0x2e8] sm:$0xf]
    %v209 = vld [vmem:[%s0 + $0x2ec] sm:$0xf]
    %v210 = vld [vmem:[%s0 + $0x2f0] sm:$0xf]
    %v211 = vld [vmem:[%s0 + $0x2f4] sm:$0xf]
    %v212 = vld [vmem:[%s0 + $0x2f8] sm:$0xf]
    %v213 = vld [vmem:[%s0 + $0x2fc] sm:$0xf]
    %v214 = vld [vmem:[%s0 + $0x300] sm:$0xf]
    %v215 = vld [vmem:[%s0 + $0x304] sm:$0xf]
    %v216 = vld [vmem:[%s0 + $0x308] sm:$0xf]
    %v217 = vld [vmem:[%s0 + $0x30c] sm:$0xf]
    %v218 = vld [vmem:[%s0 + $0x310] sm:$0xf]
    %v219 = vld [vmem:[%s0 + $0x314] sm:$0xf]
    %v220 = vld [vmem:[%s0 + $0x318] sm:$0xf]
    %v221 = vld [vmem:[%s0 + $0x31c] sm:$0xf]
    %v222 = vld [vmem:[%s0 + $0x320] sm:$0xf]
    %v223 = vld [vmem:[%s0 + $0x324] sm:$0xf]
    %v224 = vld [vmem:[%s0 + $0x328] sm:$0xf]
    %v225 = vld [vmem:[%s0 + $0x32c] sm:$0xf]
    %v226 = vld [vmem:[%s0 + $0x330] sm:$0xf]
    %v227 = vld [vmem:[%s0 + $0x334] sm:$0xf]
    %v228 = vld [vmem:[%s0 + $0x338] sm:$0xf]
    %v229 = vld [vmem:[%s0 + $0x33c] sm:$0xf]
    %v230 = vld [vmem:[%s0 + $0x340] sm:$0xf]
    %v231 = vld [vmem:[%s0 + $0x344] sm:$0xf]
    %v232 = vld [vmem:[%s0 + $0x348] sm:$0xf]
    %v233 = vld [vmem:[%s0 + $0x34c] sm:$0xf]
    %v234 = vld [vmem:[%s0 + $0x350] sm:$0xf]
    %v235 = vld [vmem:[%s0 + $0x354] sm:$0xf]
    %v236 = vld [vmem:[%s0 + $0x358] sm:$0xf]
    %v237 = vld [vmem:[%s0 + $0x35c] sm:$0xf]
    %v238 = vld [vmem:[%s0 + $0x360] sm:$0xf]
    %v239 = vld [vmem:[%s0 + $0x364] sm:$0xf]
    %v240 = vld [vmem:[%s0 + $0x368] sm:$0xf]
    %v241 = vld [vmem:[%s0 + $0x36c] sm:$0xf]
    %v242 = vld [vmem:[%s0 + $0x370] sm:$0xf]
    %v243 = vld [vmem:[%s0 + $0x374] sm:$0xf]
    %v244 = vld [vmem:[%s0 + $0x378] sm:$0xf]
    %v245 = vld [vmem:[%s0 + $0x37c] sm:$0xf]
    %v246 = vld [vmem:[%s0 + $0x380] sm:$0xf]
    %v247 = vld [vmem:[%s0 + $0x384] sm:$0xf]
    %v248 = vld [vmem:[%s0 + $0x388] sm:$0xf]
    %v249 = vld [vmem:[%s0 + $0x38c] sm:$0xf]
    %v250 = vld [vmem:[%s0 + $0x390] sm:$0xf]
    %v251 = vld [vmem:[%s0 + $0x394] sm:$0xf]
    %v252 = vld [vmem:[%s0 + $0x398] sm:$0xf]
    %v253 = vld [vmem:[%s0 + $0x39c] sm:$0xf]
    %v254 = vld [vmem:[%s0 + $0x3a0] sm:$0xf]
    %v255 = vld [vmem:[%s0 + $0x3a4] sm:$0xf]
    %v256 = vld [vmem:[%s0 + $0x3a8] sm:$0xf]
    %v257 = vld [vmem:[%s0 + $0x3ac] sm:$0xf]
    %v258 = vld [vmem:[%s0 + $0x3b0] sm:$0xf]
    %v259 = vld [vmem:[%s0 + $0x3b4] sm:$0xf]
    %v260 = vld [vmem:[%s0 + $0x3b8] sm:$0xf]
    %v261 = vld [vmem:[%s0 + $0x3bc] sm:$0xf]
    %v262 = vld [vmem:[%s0 + $0x3c0] sm:$0xf]
    %v263 = vld [vmem:[%s0 + $0x3c4] sm:$0xf]
    %v264 = vld [vmem:[%s0 + $0x3c8] sm:$0xf]
    %v265 = vld [vmem:[%s0 + $0x3cc] sm:$0xf]
    %v266 = vld [vmem:[%s0 + $0x3d0] sm:$0xf]
    %v267 = vld [vmem:[%s0 + $0x3d4] sm:$0xf]
    %v268 = vld [vmem:[%s0 + $0x3d8] sm:$0xf]
    %v269 = vld [vmem:[%s0 + $0x3dc] sm:$0xf]
    %v270 = vld [vmem:[%s0 + $0x3e0] sm:$0xf]
    %v271 = vld [vmem:[%s0 + $0x3e4] sm:$0xf]
    %v272 = vld [vmem:[%s0 + $0x3e8] sm:$0xf]
    %v273 = vld [vmem:[%s0 + $0x3ec] sm:$0xf]
    %v274 = vld [vmem:[%s0 + $0x3f0] sm:$0xf]
    %v275 = vld [vmem:[%s0 + $0x3f4] sm:$0xf]
    %v276 = vld [vmem:[%s0 + $0x3f8] sm:$0xf]
    %v277 = vld [vmem:[%s0 + $0x3fc] sm:$0xf]
    %v278 = vld [vmem:[%s1] sm:$0xf]
    %v279 = vld [vmem:[%s1 + $0x4] sm:$0xf]
    %v280 = vld [vmem:[%s2] sm:$0x1]
    %v282 = vlaneseq
    %v283 = vshrl.u32 %v282, 7
    %v284 = vsub.s32 0, %v283
    %v285 = vrot.slane %v280, %v284
    %v543 = vunpack.c.l.b16 %v22
    %v544 = vunpack.c.l.b16 %v23
    %v545 = vunpack.c.l.b16 %v24
    %v546 = vunpack.c.l.b16 %v25
    %v547 = vunpack.c.l.b16 %v26
    %v548 = vunpack.c.l.b16 %v27
    %v549 = vunpack.c.l.b16 %v28
    %v550 = vunpack.c.l.b16 %v29
    %v551 = vunpack.c.l.b16 %v30
    %v552 = vunpack.c.l.b16 %v31
    %v553 = vunpack.c.l.b16 %v32
    %v554 = vunpack.c.l.b16 %v33
    %v555 = vunpack.c.l.b16 %v34
    %v556 = vunpack.c.l.b16 %v35
    %v557 = vunpack.c.l.b16 %v36
    %v558 = vunpack.c.l.b16 %v37
    %v559 = vunpack.c.l.b16 %v38
    %v560 = vunpack.c.l.b16 %v39
    %v561 = vunpack.c.l.b16 %v40
    %v562 = vunpack.c.l.b16 %v41
    %v563 = vunpack.c.l.b16 %v42
    %v564 = vunpack.c.l.b16 %v43
    %v565 = vunpack.c.l.b16 %v44
    %v566 = vunpack.c.l.b16 %v45
    %v567 = vunpack.c.l.b16 %v46
    %v568 = vunpack.c.l.b16 %v47
    %v569 = vunpack.c.l.b16 %v48
    %v570 = vunpack.c.l.b16 %v49
    %v571 = vunpack.c.l.b16 %v50
    %v572 = vunpack.c.l.b16 %v51
    %v573 = vunpack.c.l.b16 %v52
    %v574 = vunpack.c.l.b16 %v53
    %v575 = vunpack.c.l.b16 %v54
    %v576 = vunpack.c.l.b16 %v55
    %v577 = vunpack.c.l.b16 %v56
    %v578 = vunpack.c.l.b16 %v57
    %v579 = vunpack.c.l.b16 %v58
    %v580 = vunpack.c.l.b16 %v59
    %v581 = vunpack.c.l.b16 %v60
    %v582 = vunpack.c.l.b16 %v61
    %v583 = vunpack.c.l.b16 %v62
    %v584 = vunpack.c.l.b16 %v63
    %v585 = vunpack.c.l.b16 %v64
    %v586 = vunpack.c.l.b16 %v65
    %v587 = vunpack.c.l.b16 %v66
    %v588 = vunpack.c.l.b16 %v67
    %v589 = vunpack.c.l.b16 %v68
    %v590 = vunpack.c.l.b16 %v69
    %v591 = vunpack.c.l.b16 %v70
    %v592 = vunpack.c.l.b16 %v71
    %v593 = vunpack.c.l.b16 %v72
    %v594 = vunpack.c.l.b16 %v73
    %v595 = vunpack.c.l.b16 %v74
    %v596 = vunpack.c.l.b16 %v75
    %v597 = vunpack.c.l.b16 %v76
    %v598 = vunpack.c.l.b16 %v77
    %v599 = vunpack.c.l.b16 %v78
    %v600 = vunpack.c.l.b16 %v79
    %v601 = vunpack.c.l.b16 %v80
    %v602 = vunpack.c.l.b16 %v81
    %v603 = vunpack.c.l.b16 %v82
    %v604 = vunpack.c.l.b16 %v83
    %v605 = vunpack.c.l.b16 %v84
    %v606 = vunpack.c.l.b16 %v85
    %v607 = vunpack.c.l.b16 %v86
    %v608 = vunpack.c.l.b16 %v87
    %v609 = vunpack.c.l.b16 %v88
    %v610 = vunpack.c.l.b16 %v89
    %v611 = vunpack.c.l.b16 %v90
    %v612 = vunpack.c.l.b16 %v91
    %v613 = vunpack.c.l.b16 %v92
    %v614 = vunpack.c.l.b16 %v93
    %v615 = vunpack.c.l.b16 %v94
    %v616 = vunpack.c.l.b16 %v95
    %v617 = vunpack.c.l.b16 %v96
    %v618 = vunpack.c.l.b16 %v97
    %v619 = vunpack.c.l.b16 %v98
    %v620 = vunpack.c.l.b16 %v99
    %v621 = vunpack.c.l.b16 %v100
    %v622 = vunpack.c.l.b16 %v101
    %v623 = vunpack.c.l.b16 %v102
    %v624 = vunpack.c.l.b16 %v103
    %v625 = vunpack.c.l.b16 %v104
    %v626 = vunpack.c.l.b16 %v105
    %v627 = vunpack.c.l.b16 %v106
    %v628 = vunpack.c.l.b16 %v107
    %v629 = vunpack.c.l.b16 %v108
    %v630 = vunpack.c.l.b16 %v109
    %v631 = vunpack.c.l.b16 %v110
    %v632 = vunpack.c.l.b16 %v111
    %v633 = vunpack.c.l.b16 %v112
    %v634 = vunpack.c.l.b16 %v113
    %v635 = vunpack.c.l.b16 %v114
    %v636 = vunpack.c.l.b16 %v115
    %v637 = vunpack.c.l.b16 %v116
    %v638 = vunpack.c.l.b16 %v117
    %v639 = vunpack.c.l.b16 %v118
    %v640 = vunpack.c.l.b16 %v119
    %v641 = vunpack.c.l.b16 %v120
    %v642 = vunpack.c.l.b16 %v121
    %v643 = vunpack.c.l.b16 %v122
    %v644 = vunpack.c.l.b16 %v123
    %v645 = vunpack.c.l.b16 %v124
    %v646 = vunpack.c.l.b16 %v125
    %v647 = vunpack.c.l.b16 %v126
    %v648 = vunpack.c.l.b16 %v127
    %v649 = vunpack.c.l.b16 %v128
    %v650 = vunpack.c.l.b16 %v129
    %v651 = vunpack.c.l.b16 %v130
    %v652 = vunpack.c.l.b16 %v131
    %v653 = vunpack.c.l.b16 %v132
    %v654 = vunpack.c.l.b16 %v133
    %v655 = vunpack.c.l.b16 %v134
    %v656 = vunpack.c.l.b16 %v135
    %v657 = vunpack.c.l.b16 %v136
    %v658 = vunpack.c.l.b16 %v137
    %v659 = vunpack.c.l.b16 %v138
    %v660 = vunpack.c.l.b16 %v139
    %v661 = vunpack.c.l.b16 %v140
    %v662 = vunpack.c.l.b16 %v141
    %v663 = vunpack.c.l.b16 %v142
    %v664 = vunpack.c.l.b16 %v143
    %v665 = vunpack.c.l.b16 %v144
    %v666 = vunpack.c.l.b16 %v145
    %v667 = vunpack.c.l.b16 %v146
    %v668 = vunpack.c.l.b16 %v147
    %v669 = vunpack.c.l.b16 %v148
    %v670 = vunpack.c.l.b16 %v149
    %v671 = vunpack.c.l.b16 %v150
    %v672 = vunpack.c.l.b16 %v151
    %v673 = vunpack.c.l.b16 %v152
    %v674 = vunpack.c.l.b16 %v153
    %v675 = vunpack.c.l.b16 %v154
    %v676 = vunpack.c.l.b16 %v155
    %v677 = vunpack.c.l.b16 %v156
    %v678 = vunpack.c.l.b16 %v157
    %v679 = vunpack.c.l.b16 %v158
    %v680 = vunpack.c.l.b16 %v159
    %v681 = vunpack.c.l.b16 %v160
    %v682 = vunpack.c.l.b16 %v161
    %v683 = vunpack.c.l.b16 %v162
    %v684 = vunpack.c.l.b16 %v163
    %v685 = vunpack.c.l.b16 %v164
    %v686 = vunpack.c.l.b16 %v165
    %v687 = vunpack.c.l.b16 %v166
    %v688 = vunpack.c.l.b16 %v167
    %v689 = vunpack.c.l.b16 %v168
    %v690 = vunpack.c.l.b16 %v169
    %v691 = vunpack.c.l.b16 %v170
    %v692 = vunpack.c.l.b16 %v171
    %v693 = vunpack.c.l.b16 %v172
    %v694 = vunpack.c.l.b16 %v173
    %v695 = vunpack.c.l.b16 %v174
    %v696 = vunpack.c.l.b16 %v175
    %v697 = vunpack.c.l.b16 %v176
    %v698 = vunpack.c.l.b16 %v177
    %v699 = vunpack.c.l.b16 %v178
    %v700 = vunpack.c.l.b16 %v179
    %v701 = vunpack.c.l.b16 %v180
    %v702 = vunpack.c.l.b16 %v181
    %v703 = vunpack.c.l.b16 %v182
    %v704 = vunpack.c.l.b16 %v183
    %v705 = vunpack.c.l.b16 %v184
    %v706 = vunpack.c.l.b16 %v185
    %v707 = vunpack.c.l.b16 %v186
    %v708 = vunpack.c.l.b16 %v187
    %v709 = vunpack.c.l.b16 %v188
    %v710 = vunpack.c.l.b16 %v189
    %v711 = vunpack.c.l.b16 %v190
    %v712 = vunpack.c.l.b16 %v191
    %v713 = vunpack.c.l.b16 %v192
    %v714 = vunpack.c.l.b16 %v193
    %v715 = vunpack.c.l.b16 %v194
    %v716 = vunpack.c.l.b16 %v195
    %v717 = vunpack.c.l.b16 %v196
    %v718 = vunpack.c.l.b16 %v197
    %v719 = vunpack.c.l.b16 %v198
    %v720 = vunpack.c.l.b16 %v199
    %v721 = vunpack.c.l.b16 %v200
    %v722 = vunpack.c.l.b16 %v201
    %v723 = vunpack.c.l.b16 %v202
    %v724 = vunpack.c.l.b16 %v203
    %v725 = vunpack.c.l.b16 %v204
    %v726 = vunpack.c.l.b16 %v205
    %v727 = vunpack.c.l.b16 %v206
    %v728 = vunpack.c.l.b16 %v207
    %v729 = vunpack.c.l.b16 %v208
    %v730 = vunpack.c.l.b16 %v209
    %v731 = vunpack.c.l.b16 %v210
    %v732 = vunpack.c.l.b16 %v211
    %v733 = vunpack.c.l.b16 %v212
    %v734 = vunpack.c.l.b16 %v213
    %v735 = vunpack.c.l.b16 %v214
    %v736 = vunpack.c.l.b16 %v215
    %v737 = vunpack.c.l.b16 %v216
    %v738 = vunpack.c.l.b16 %v217
    %v739 = vunpack.c.l.b16 %v218
    %v740 = vunpack.c.l.b16 %v219
    %v741 = vunpack.c.l.b16 %v220
    %v742 = vunpack.c.l.b16 %v221
    %v743 = vunpack.c.l.b16 %v222
    %v744 = vunpack.c.l.b16 %v223
    %v745 = vunpack.c.l.b16 %v224
    %v746 = vunpack.c.l.b16 %v225
    %v747 = vunpack.c.l.b16 %v226
    %v748 = vunpack.c.l.b16 %v227
    %v749 = vunpack.c.l.b16 %v228
    %v750 = vunpack.c.l.b16 %v229
    %v751 = vunpack.c.l.b16 %v230
    %v752 = vunpack.c.l.b16 %v231
    %v753 = vunpack.c.l.b16 %v232
    %v754 = vunpack.c.l.b16 %v233
    %v755 = vunpack.c.l.b16 %v234
    %v756 = vunpack.c.l.b16 %v235
    %v757 = vunpack.c.l.b16 %v236
    %v758 = vunpack.c.l.b16 %v237
    %v759 = vunpack.c.l.b16 %v238
    %v760 = vunpack.c.l.b16 %v239
    %v761 = vunpack.c.l.b16 %v240
    %v762 = vunpack.c.l.b16 %v241
    %v763 = vunpack.c.l.b16 %v242
    %v764 = vunpack.c.l.b16 %v243
    %v765 = vunpack.c.l.b16 %v244
    %v766 = vunpack.c.l.b16 %v245
    %v767 = vunpack.c.l.b16 %v246
    %v768 = vunpack.c.l.b16 %v247
    %v769 = vunpack.c.l.b16 %v248
    %v770 = vunpack.c.l.b16 %v249
    %v771 = vunpack.c.l.b16 %v250
    %v772 = vunpack.c.l.b16 %v251
    %v773 = vunpack.c.l.b16 %v252
    %v774 = vunpack.c.l.b16 %v253
    %v775 = vunpack.c.l.b16 %v254
    %v776 = vunpack.c.l.b16 %v255
    %v777 = vunpack.c.l.b16 %v256
    %v778 = vunpack.c.l.b16 %v257
    %v779 = vunpack.c.l.b16 %v258
    %v780 = vunpack.c.l.b16 %v259
    %v781 = vunpack.c.l.b16 %v260
    %v782 = vunpack.c.l.b16 %v261
    %v783 = vunpack.c.l.b16 %v262
    %v784 = vunpack.c.l.b16 %v263
    %v785 = vunpack.c.l.b16 %v264
    %v786 = vunpack.c.l.b16 %v265
    %v787 = vunpack.c.l.b16 %v266
    %v788 = vunpack.c.l.b16 %v267
    %v789 = vunpack.c.l.b16 %v268
    %v790 = vunpack.c.l.b16 %v269
    %v791 = vunpack.c.l.b16 %v270
    %v792 = vunpack.c.l.b16 %v271
    %v793 = vunpack.c.l.b16 %v272
    %v794 = vunpack.c.l.b16 %v273
    %v795 = vunpack.c.l.b16 %v274
    %v796 = vunpack.c.l.b16 %v275
    %v797 = vunpack.c.l.b16 %v276
    %v798 = vunpack.c.l.b16 %v277
    %v799 = vpack.c.b16 %v544, %v543
    %v800 = vpack.c.b16 %v546, %v545
    %v801 = vpack.c.b16 %v548, %v547
    %v802 = vpack.c.b16 %v550, %v549
    %v803 = vpack.c.b16 %v552, %v551
    %v804 = vpack.c.b16 %v554, %v553
    %v805 = vpack.c.b16 %v556, %v555
    %v806 = vpack.c.b16 %v558, %v557
    %v807 = vpack.c.b16 %v560, %v559
    %v808 = vpack.c.b16 %v562, %v561
    %v809 = vpack.c.b16 %v564, %v563
    %v810 = vpack.c.b16 %v566, %v565
    %v811 = vpack.c.b16 %v568, %v567
    %v812 = vpack.c.b16 %v570, %v569
    %v813 = vpack.c.b16 %v572, %v571
    %v814 = vpack.c.b16 %v574, %v573
    %v815 = vpack.c.b16 %v576, %v575
    %v816 = vpack.c.b16 %v578, %v577
    %v817 = vpack.c.b16 %v580, %v579
    %v818 = vpack.c.b16 %v582, %v581
    %v819 = vpack.c.b16 %v584, %v583
    %v820 = vpack.c.b16 %v586, %v585
    %v821 = vpack.c.b16 %v588, %v587
    %v822 = vpack.c.b16 %v590, %v589
    %v823 = vpack.c.b16 %v592, %v591
    %v824 = vpack.c.b16 %v594, %v593
    %v825 = vpack.c.b16 %v596, %v595
    %v826 = vpack.c.b16 %v598, %v597
    %v827 = vpack.c.b16 %v600, %v599
    %v828 = vpack.c.b16 %v602, %v601
    %v829 = vpack.c.b16 %v604, %v603
    %v830 = vpack.c.b16 %v606, %v605
    %v831 = vpack.c.b16 %v608, %v607
    %v832 = vpack.c.b16 %v610, %v609
    %v833 = vpack.c.b16 %v612, %v611
    %v834 = vpack.c.b16 %v614, %v613
    %v835 = vpack.c.b16 %v616, %v615
    %v836 = vpack.c.b16 %v618, %v617
    %v837 = vpack.c.b16 %v620, %v619
    %v838 = vpack.c.b16 %v622, %v621
    %v839 = vpack.c.b16 %v624, %v623
    %v840 = vpack.c.b16 %v626, %v625
    %v841 = vpack.c.b16 %v628, %v627
    %v842 = vpack.c.b16 %v630, %v629
    %v843 = vpack.c.b16 %v632, %v631
    %v844 = vpack.c.b16 %v634, %v633
    %v845 = vpack.c.b16 %v636, %v635
    %v846 = vpack.c.b16 %v638, %v637
    %v847 = vpack.c.b16 %v640, %v639
    %v848 = vpack.c.b16 %v642, %v641
    %v849 = vpack.c.b16 %v644, %v643
    %v850 = vpack.c.b16 %v646, %v645
    %v851 = vpack.c.b16 %v648, %v647
    %v852 = vpack.c.b16 %v650, %v649
    %v853 = vpack.c.b16 %v652, %v651
    %v854 = vpack.c.b16 %v654, %v653
    %v855 = vpack.c.b16 %v656, %v655
    %v856 = vpack.c.b16 %v658, %v657
    %v857 = vpack.c.b16 %v660, %v659
    %v858 = vpack.c.b16 %v662, %v661
    %v859 = vpack.c.b16 %v664, %v663
    %v860 = vpack.c.b16 %v666, %v665
    %v861 = vpack.c.b16 %v668, %v667
    %v862 = vpack.c.b16 %v670, %v669
    %v863 = vpack.c.b16 %v672, %v671
    %v864 = vpack.c.b16 %v674, %v673
    %v865 = vpack.c.b16 %v676, %v675
    %v866 = vpack.c.b16 %v678, %v677
    %v867 = vpack.c.b16 %v680, %v679
    %v868 = vpack.c.b16 %v682, %v681
    %v869 = vpack.c.b16 %v684, %v683
    %v870 = vpack.c.b16 %v686, %v685
    %v871 = vpack.c.b16 %v688, %v687
    %v872 = vpack.c.b16 %v690, %v689
    %v873 = vpack.c.b16 %v692, %v691
    %v874 = vpack.c.b16 %v694, %v693
    %v875 = vpack.c.b16 %v696, %v695
    %v876 = vpack.c.b16 %v698, %v697
    %v877 = vpack.c.b16 %v700, %v699
    %v878 = vpack.c.b16 %v702, %v701
    %v879 = vpack.c.b16 %v704, %v703
    %v880 = vpack.c.b16 %v706, %v705
    %v881 = vpack.c.b16 %v708, %v707
    %v882 = vpack.c.b16 %v710, %v709
    %v883 = vpack.c.b16 %v712, %v711
    %v884 = vpack.c.b16 %v714, %v713
    %v885 = vpack.c.b16 %v716, %v715
    %v886 = vpack.c.b16 %v718, %v717
    %v887 = vpack.c.b16 %v720, %v719
    %v888 = vpack.c.b16 %v722, %v721
    %v889 = vpack.c.b16 %v724, %v723
    %v890 = vpack.c.b16 %v726, %v725
    %v891 = vpack.c.b16 %v728, %v727
    %v892 = vpack.c.b16 %v730, %v729
    %v893 = vpack.c.b16 %v732, %v731
    %v894 = vpack.c.b16 %v734, %v733
    %v895 = vpack.c.b16 %v736, %v735
    %v896 = vpack.c.b16 %v738, %v737
    %v897 = vpack.c.b16 %v740, %v739
    %v898 = vpack.c.b16 %v742, %v741
    %v899 = vpack.c.b16 %v744, %v743
    %v900 = vpack.c.b16 %v746, %v745
    %v901 = vpack.c.b16 %v748, %v747
    %v902 = vpack.c.b16 %v750, %v749
    %v903 = vpack.c.b16 %v752, %v751
    %v904 = vpack.c.b16 %v754, %v753
    %v905 = vpack.c.b16 %v756, %v755
    %v906 = vpack.c.b16 %v758, %v757
    %v907 = vpack.c.b16 %v760, %v759
    %v908 = vpack.c.b16 %v762, %v761
    %v909 = vpack.c.b16 %v764, %v763
    %v910 = vpack.c.b16 %v766, %v765
    %v911 = vpack.c.b16 %v768, %v767
    %v912 = vpack.c.b16 %v770, %v769
    %v913 = vpack.c.b16 %v772, %v771
    %v914 = vpack.c.b16 %v774, %v773
    %v915 = vpack.c.b16 %v776, %v775
    %v916 = vpack.c.b16 %v778, %v777
    %v917 = vpack.c.b16 %v780, %v779
    %v918 = vpack.c.b16 %v782, %v781
    %v919 = vpack.c.b16 %v784, %v783
    %v920 = vpack.c.b16 %v786, %v785
    %v921 = vpack.c.b16 %v788, %v787
    %v922 = vpack.c.b16 %v790, %v789
    %v923 = vpack.c.b16 %v792, %v791
    %v924 = vpack.c.b16 %v794, %v793
    %v925 = vpack.c.b16 %v796, %v795
    %v926 = vpack.c.b16 %v798, %v797
    %v929 = vunpack.c.l.b16 %v278
    %v930 = vunpack.c.l.b16 %v279
    %v931 = vpack.c.b16 %v930, %v929
    %vm933 = vcmask 130048
    %v935 = vsel %vm933, %v799, 0
    %v938 = vsel %vm933, %v800, 0
    %v941 = vsel %vm933, %v801, 0
    %v944 = vsel %vm933, %v802, 0
    %v947 = vsel %vm933, %v803, 0
    %v950 = vsel %vm933, %v804, 0
    %v953 = vsel %vm933, %v805, 0
    %v956 = vsel %vm933, %v806, 0
    %v959 = vsel %vm933, %v807, 0
    %v962 = vsel %vm933, %v808, 0
    %v965 = vsel %vm933, %v809, 0
    %v968 = vsel %vm933, %v810, 0
    %v971 = vsel %vm933, %v811, 0
    %v974 = vsel %vm933, %v812, 0
    %v977 = vsel %vm933, %v813, 0
    %v980 = vsel %vm933, %v814, 0
    %v983 = vsel %vm933, %v815, 0
    %v986 = vsel %vm933, %v816, 0
    %v989 = vsel %vm933, %v817, 0
    %v992 = vsel %vm933, %v818, 0
    %v995 = vsel %vm933, %v819, 0
    %v998 = vsel %vm933, %v820, 0
    %v1001 = vsel %vm933, %v821, 0
    %v1004 = vsel %vm933, %v822, 0
    %v1007 = vsel %vm933, %v823, 0
    %v1010 = vsel %vm933, %v824, 0
    %v1013 = vsel %vm933, %v825, 0
    %v1016 = vsel %vm933, %v826, 0
    %v1019 = vsel %vm933, %v827, 0
    %v1022 = vsel %vm933, %v828, 0
    %v1025 = vsel %vm933, %v829, 0
    %v1028 = vsel %vm933, %v830, 0
    %v1031 = vsel %vm933, %v831, 0
    %v1034 = vsel %vm933, %v832, 0
    %v1037 = vsel %vm933, %v833, 0
    %v1040 = vsel %vm933, %v834, 0
    %v1043 = vsel %vm933, %v835, 0
    %v1046 = vsel %vm933, %v836, 0
    %v1049 = vsel %vm933, %v837, 0
    %v1052 = vsel %vm933, %v838, 0
    %v1055 = vsel %vm933, %v839, 0
    %v1058 = vsel %vm933, %v840, 0
    %v1061 = vsel %vm933, %v841, 0
    %v1064 = vsel %vm933, %v842, 0
    %v1067 = vsel %vm933, %v843, 0
    %v1070 = vsel %vm933, %v844, 0
    %v1073 = vsel %vm933, %v845, 0
    %v1076 = vsel %vm933, %v846, 0
    %v1079 = vsel %vm933, %v847, 0
    %v1082 = vsel %vm933, %v848, 0
    %v1085 = vsel %vm933, %v849, 0
    %v1088 = vsel %vm933, %v850, 0
    %v1091 = vsel %vm933, %v851, 0
    %v1094 = vsel %vm933, %v852, 0
    %v1097 = vsel %vm933, %v853, 0
    %v1100 = vsel %vm933, %v854, 0
    %v1103 = vsel %vm933, %v855, 0
    %v1106 = vsel %vm933, %v856, 0
    %v1109 = vsel %vm933, %v857, 0
    %v1112 = vsel %vm933, %v858, 0
    %v1115 = vsel %vm933, %v859, 0
    %v1118 = vsel %vm933, %v860, 0
    %v1121 = vsel %vm933, %v861, 0
    %v1124 = vsel %vm933, %v862, 0
    %v1127 = vsel %vm933, %v863, 0
    %v1130 = vsel %vm933, %v864, 0
    %v1133 = vsel %vm933, %v865, 0
    %v1136 = vsel %vm933, %v866, 0
    %v1139 = vsel %vm933, %v867, 0
    %v1142 = vsel %vm933, %v868, 0
    %v1145 = vsel %vm933, %v869, 0
    %v1148 = vsel %vm933, %v870, 0
    %v1151 = vsel %vm933, %v871, 0
    %v1154 = vsel %vm933, %v872, 0
    %v1157 = vsel %vm933, %v873, 0
    %v1160 = vsel %vm933, %v874, 0
    %v1163 = vsel %vm933, %v875, 0
    %v1166 = vsel %vm933, %v876, 0
    %v1169 = vsel %vm933, %v877, 0
    %v1172 = vsel %vm933, %v878, 0
    %v1175 = vsel %vm933, %v879, 0
    %v1178 = vsel %vm933, %v880, 0
    %v1181 = vsel %vm933, %v881, 0
    %v1184 = vsel %vm933, %v882, 0
    %v1187 = vsel %vm933, %v883, 0
    %v1190 = vsel %vm933, %v884, 0
    %v1193 = vsel %vm933, %v885, 0
    %v1196 = vsel %vm933, %v886, 0
    %v1199 = vsel %vm933, %v887, 0
    %v1202 = vsel %vm933, %v888, 0
    %v1205 = vsel %vm933, %v889, 0
    %v1208 = vsel %vm933, %v890, 0
    %v1211 = vsel %vm933, %v891, 0
    %v1214 = vsel %vm933, %v892, 0
    %v1217 = vsel %vm933, %v893, 0
    %v1220 = vsel %vm933, %v894, 0
    %v1223 = vsel %vm933, %v895, 0
    %v1226 = vsel %vm933, %v896, 0
    %v1229 = vsel %vm933, %v897, 0
    %v1232 = vsel %vm933, %v898, 0
    %v1235 = vsel %vm933, %v899, 0
    %v1238 = vsel %vm933, %v900, 0
    %v1241 = vsel %vm933, %v901, 0
    %v1244 = vsel %vm933, %v902, 0
    %v1247 = vsel %vm933, %v903, 0
    %v1250 = vsel %vm933, %v904, 0
    %v1253 = vsel %vm933, %v905, 0
    %v1256 = vsel %vm933, %v906, 0
    %v1259 = vsel %vm933, %v907, 0
    %v1262 = vsel %vm933, %v908, 0
    %v1265 = vsel %vm933, %v909, 0
    %v1268 = vsel %vm933, %v910, 0
    %v1271 = vsel %vm933, %v911, 0
    %v1274 = vsel %vm933, %v912, 0
    %v1277 = vsel %vm933, %v913, 0
    %v1280 = vsel %vm933, %v914, 0
    %v1283 = vsel %vm933, %v915, 0
    %v1286 = vsel %vm933, %v916, 0
    %v1289 = vsel %vm933, %v917, 0
    %v1292 = vsel %vm933, %v918, 0
    %v1295 = vsel %vm933, %v919, 0
    %v1298 = vsel %vm933, %v920, 0
    %v1301 = vsel %vm933, %v921, 0
    %v1304 = vsel %vm933, %v922, 0
    %v1307 = vsel %vm933, %v923, 0
    %v1310 = vsel %vm933, %v924, 0
    %v1313 = vsel %vm933, %v925, 0
    %v1316 = vsel %vm933, %v926, 0
    %1318 = vmatprep.subr.bf16.mxu0 0
    %1319 = vmatpush1.bf16.msra.mxu0 %v931
    %1320 = vmatprep.subr.bf16.mxu0 0
    %1321 = vmatpush1.bf16.msra.mxu0 0
    %1322 = vmatprep.subr.bf16.mxu0 0
    %1323 = vmatpush1.bf16.msra.mxu0 0
    %1324 = vmatprep.subr.bf16.mxu0 0
    %1325 = vmatpush1.bf16.msra.mxu0 0
    %1326 = vmatprep.subr.bf16.mxu0 0
    %1327 = vmatpush1.bf16.msra.mxu0 0
    %1328 = vmatprep.subr.bf16.mxu0 0
    %1329 = vmatpush1.bf16.msra.mxu0 0
    %1330 = vmatprep.subr.bf16.mxu0 0
    %1331 = vmatpush1.bf16.msra.mxu0 0
    %1332 = vmatprep.subr.bf16.mxu0 0
    %1333 = vmatpush1.bf16.msra.mxu0 0
    %1334 = vmatprep.subr.bf16.mxu0 0
    %1335 = vmatpush1.bf16.msra.mxu0 0
    %1336 = vmatprep.subr.bf16.mxu0 0
    %1337 = vmatpush1.bf16.msra.mxu0 0
    %1338 = vmatprep.subr.bf16.mxu0 0
    %1339 = vmatpush1.bf16.msra.mxu0 0
    %1340 = vmatprep.subr.bf16.mxu0 0
    %1341 = vmatpush1.bf16.msra.mxu0 0
    %1342 = vmatprep.subr.bf16.mxu0 0
    %1343 = vmatpush1.bf16.msra.mxu0 0
    %1344 = vmatprep.subr.bf16.mxu0 0
    %1345 = vmatpush1.bf16.msra.mxu0 0
    %1346 = vmatprep.subr.bf16.mxu0 0
    %1347 = vmatpush1.bf16.msra.mxu0 0
    %1348 = vmatprep.subr.bf16.mxu0 0
    %1349 = vmatpush1.bf16.msra.mxu0 0
    %1350 = vmatprep.mubr.bf16.mxu0 0
    %1351 = vmatmul.mubr.bf16.gmra.mrb[0].mxu0 %v935
    %v1352 = vpop.f32.mrb[0].mxu0
    %v1353 = vadd.f32 %v285, %v1352
    %v1354 = vpop.f32.mrb[0].mxu0
    %v1355 = vpop.f32.mrb[0].mxu0
    %v1356 = vadd.f32 %v285, %v1355
    %v1357 = vpop.f32.mrb[0].mxu0
    %1358 = vmatprep.mubr.bf16.mxu0 0
    %1359 = vmatmul.mubr.bf16.gmra.mrb[0].mxu0 %v938
    %v1360 = vpop.f32.mrb[0].mxu0
    %v1361 = vadd.f32 %v285, %v1360
    %v1362 = vpop.f32.mrb[0].mxu0
    %v1363 = vpop.f32.mrb[0].mxu0
    %v1364 = vadd.f32 %v285, %v1363
    %v1365 = vpop.f32.mrb[0].mxu0
    %1366 = vmatprep.mubr.bf16.mxu0 0
    %1367 = vmatmul.mubr.bf16.gmra.mrb[0].mxu0 %v941
    %v1368 = vpop.f32.mrb[0].mxu0
    %v1369 = vadd.f32 %v285, %v1368
    %v1370 = vpop.f32.mrb[0].mxu0
    %v1371 = vpop.f32.mrb[0].mxu0
    %v1372 = vadd.f32 %v285, %v1371
    %v1373 = vpop.f32.mrb[0].mxu0
    %1374 = vmatprep.mubr.bf16.mxu0 0
    %1375 = vmatmul.mubr.bf16.gmra.mrb[0].mxu0 %v944
    %v1376 = vpop.f32.mrb[0].mxu0
    %v1377 = vadd.f32 %v285, %v1376
    %v1378 = vpop.f32.mrb[0].mxu0
    %v1379 = vpop.f32.mrb[0].mxu0
    %v1380 = vadd.f32 %v285, %v1379
    %v1381 = vpop.f32.mrb[0].mxu0
    %1382 = vmatprep.mubr.bf16.mxu0 0
    %1383 = vmatmul.mubr.bf16.gmra.mrb[0].mxu0 %v947
    %v1384 = vpop.f32.mrb[0].mxu0
    %v1385 = vadd.f32 %v285, %v1384
    %v1386 = vpop.f32.mrb[0].mxu0
    %v1387 = vpop.f32.mrb[0].mxu0
    %v1388 = vadd.f32 %v285, %v1387
    %v1389 = vpop.f32.mrb[0].mxu0
    %1390 = vmatprep.mubr.bf16.mxu0 0
    %1391 = vmatmul.mubr.bf16.gmra.mrb[0].mxu0 %v950
    %v1392 = vpop.f32.mrb[0].mxu0
    %v1393 = vadd.f32 %v285, %v1392
    %v1394 = vpop.f32.mrb[0].mxu0
    %v1395 = vpop.f32.mrb[0].mxu0
    %v1396 = vadd.f32 %v285, %v1395
    %v1397 = vpop.f32.mrb[0].mxu0
    %1398 = vmatprep.mubr.bf16.mxu0 0
    %1399 = vmatmul.mubr.bf16.gmra.mrb[0].mxu0 %v953
    %v1400 = vpop.f32.mrb[0].mxu0
    %v1401 = vadd.f32 %v285, %v1400
    %v1402 = vpop.f32.mrb[0].mxu0
    %v1403 = vpop.f32.mrb[0].mxu0
    %v1404 = vadd.f32 %v285, %v1403
    %v1405 = vpop.f32.mrb[0].mxu0
    %1406 = vmatprep.mubr.bf16.mxu0 0
    %1407 = vmatmul.mubr.bf16.gmra.mrb[0].mxu0 %v956
    %v1408 = vpop.f32.mrb[0].mxu0
    %v1409 = vadd.f32 %v285, %v1408
    %v1410 = vpop.f32.mrb[0].mxu0
    %v1411 = vpop.f32.mrb[0].mxu0
    %v1412 = vadd.f32 %v285, %v1411
    %v1413 = vpop.f32.mrb[0].mxu0
    %1414 = vmatprep.mubr.bf16.mxu0 0
    %1415 = vmatmul.mubr.bf16.gmra.mrb[0].mxu0 %v959
    %v1416 = vpop.f32.mrb[0].mxu0
    %v1417 = vadd.f32 %v285, %v1416
    %v1418 = vpop.f32.mrb[0].mxu0
    %v1419 = vpop.f32.mrb[0].mxu0
    %v1420 = vadd.f32 %v285, %v1419
    %v1421 = vpop.f32.mrb[0].mxu0
    %1422 = vmatprep.mubr.bf16.mxu0 0
    %1423 = vmatmul.mubr.bf16.gmra.mrb[0].mxu0 %v962
    %v1424 = vpop.f32.mrb[0].mxu0
    %v1425 = vadd.f32 %v285, %v1424
    %v1426 = vpop.f32.mrb[0].mxu0
    %v1427 = vpop.f32.mrb[0].mxu0
    %v1428 = vadd.f32 %v285, %v1427
    %v1429 = vpop.f32.mrb[0].mxu0
    %1430 = vmatprep.mubr.bf16.mxu0 0
    %1431 = vmatmul.mubr.bf16.gmra.mrb[0].mxu0 %v965
    %v1432 = vpop.f32.mrb[0].mxu0
    %v1433 = vadd.f32 %v285, %v1432
    %v1434 = vpop.f32.mrb[0].mxu0
    %v1435 = vpop.f32.mrb[0].mxu0
    %v1436 = vadd.f32 %v285, %v1435
    %v1437 = vpop.f32.mrb[0].mxu0
    %1438 = vmatprep.mubr.bf16.mxu0 0
    %1439 = vmatmul.mubr.bf16.gmra.mrb[0].mxu0 %v968
    %v1440 = vpop.f32.mrb[0].mxu0
    %v1441 = vadd.f32 %v285, %v1440
    %v1442 = vpop.f32.mrb[0].mxu0
    %v1443 = vpop.f32.mrb[0].mxu0
    %v1444 = vadd.f32 %v285, %v1443
    %v1445 = vpop.f32.mrb[0].mxu0
    %1446 = vmatprep.mubr.bf16.mxu0 0
    %1447 = vmatmul.mubr.bf16.gmra.mrb[0].mxu0 %v971
    %v1448 = vpop.f32.mrb[0].mxu0
    %v1449 = vadd.f32 %v285, %v1448
    %v1450 = vpop.f32.mrb[0].mxu0
    %v1451 = vpop.f32.mrb[0].mxu0
    %v1452 = vadd.f32 %v285, %v1451
    %v1453 = vpop.f32.mrb[0].mxu0
    %1454 = vmatprep.mubr.bf16.mxu0 0
    %1455 = vmatmul.mubr.bf16.gmra.mrb[0].mxu0 %v974
    %v1456 = vpop.f32.mrb[0].mxu0
    %v1457 = vadd.f32 %v285, %v1456
    %v1458 = vpop.f32.mrb[0].mxu0
    %v1459 = vpop.f32.mrb[0].mxu0
    %v1460 = vadd.f32 %v285, %v1459
    %v1461 = vpop.f32.mrb[0].mxu0
    %1462 = vmatprep.mubr.bf16.mxu0 0
    %1463 = vmatmul.mubr.bf16.gmra.mrb[0].mxu0 %v977
    %v1464 = vpop.f32.mrb[0].mxu0
    %v1465 = vadd.f32 %v285, %v1464
    %v1466 = vpop.f32.mrb[0].mxu0
    %v1467 = vpop.f32.mrb[0].mxu0
    %v1468 = vadd.f32 %v285, %v1467
    %v1469 = vpop.f32.mrb[0].mxu0
    %1470 = vmatprep.mubr.bf16.mxu0 0
    %1471 = vmatmul.mubr.bf16.gmra.mrb[0].mxu0 %v980
    %v1472 = vpop.f32.mrb[0].mxu0
    %v1473 = vadd.f32 %v285, %v1472
    %v1474 = vpop.f32.mrb[0].mxu0
    %v1475 = vpop.f32.mrb[0].mxu0
    %v1476 = vadd.f32 %v285, %v1475
    %v1477 = vpop.f32.mrb[0].mxu0
    %1478 = vmatprep.mubr.bf16.mxu0 0
    %1479 = vmatmul.mubr.bf16.gmra.mrb[0].mxu0 %v983
    %v1480 = vpop.f32.mrb[0].mxu0
    %v1481 = vadd.f32 %v285, %v1480
    %v1482 = vpop.f32.mrb[0].mxu0
    %v1483 = vpop.f32.mrb[0].mxu0
    %v1484 = vadd.f32 %v285, %v1483
    %v1485 = vpop.f32.mrb[0].mxu0
    %1486 = vmatprep.mubr.bf16.mxu0 0
    %1487 = vmatmul.mubr.bf16.gmra.mrb[0].mxu0 %v986
    %v1488 = vpop.f32.mrb[0].mxu0
    %v1489 = vadd.f32 %v285, %v1488
    %v1490 = vpop.f32.mrb[0].mxu0
    %v1491 = vpop.f32.mrb[0].mxu0
    %v1492 = vadd.f32 %v285, %v1491
    %v1493 = vpop.f32.mrb[0].mxu0
    %1494 = vmatprep.mubr.bf16.mxu0 0
    %1495 = vmatmul.mubr.bf16.gmra.mrb[0].mxu0 %v989
    %v1496 = vpop.f32.mrb[0].mxu0
    %v1497 = vadd.f32 %v285, %v1496
    %v1498 = vpop.f32.mrb[0].mxu0
    %v1499 = vpop.f32.mrb[0].mxu0
    %v1500 = vadd.f32 %v285, %v1499
    %v1501 = vpop.f32.mrb[0].mxu0
    %1502 = vmatprep.mubr.bf16.mxu0 0
    %1503 = vmatmul.mubr.bf16.gmra.mrb[0].mxu0 %v992
    %v1504 = vpop.f32.mrb[0].mxu0
    %v1505 = vadd.f32 %v285, %v1504
    %v1506 = vpop.f32.mrb[0].mxu0
    %v1507 = vpop.f32.mrb[0].mxu0
    %v1508 = vadd.f32 %v285, %v1507
    %v1509 = vpop.f32.mrb[0].mxu0
    %1510 = vmatprep.mubr.bf16.mxu0 0
    %1511 = vmatmul.mubr.bf16.gmra.mrb[0].mxu0 %v995
    %v1512 = vpop.f32.mrb[0].mxu0
    %v1513 = vadd.f32 %v285, %v1512
    %v1514 = vpop.f32.mrb[0].mxu0
    %v1515 = vpop.f32.mrb[0].mxu0
    %v1516 = vadd.f32 %v285, %v1515
    %v1517 = vpop.f32.mrb[0].mxu0
    %1518 = vmatprep.mubr.bf16.mxu0 0
    %1519 = vmatmul.mubr.bf16.gmra.mrb[0].mxu0 %v998
    %v1520 = vpop.f32.mrb[0].mxu0
    %v1521 = vadd.f32 %v285, %v1520
    %v1522 = vpop.f32.mrb[0].mxu0
    %v1523 = vpop.f32.mrb[0].mxu0
    %v1524 = vadd.f32 %v285, %v1523
    %v1525 = vpop.f32.mrb[0].mxu0
    %1526 = vmatprep.mubr.bf16.mxu0 0
    %1527 = vmatmul.mubr.bf16.gmra.mrb[0].mxu0 %v1001
    %v1528 = vpop.f32.mrb[0].mxu0
    %v1529 = vadd.f32 %v285, %v1528
    %v1530 = vpop.f32.mrb[0].mxu0
    %v1531 = vpop.f32.mrb[0].mxu0
    %v1532 = vadd.f32 %v285, %v1531
    %v1533 = vpop.f32.mrb[0].mxu0
    %1534 = vmatprep.mubr.bf16.mxu0 0
    %1535 = vmatmul.mubr.bf16.gmra.mrb[0].mxu0 %v1004
    %v1536 = vpop.f32.mrb[0].mxu0
    %v1537 = vadd.f32 %v285, %v1536
    %v1538 = vpop.f32.mrb[0].mxu0
    %v1539 = vpop.f32.mrb[0].mxu0
    %v1540 = vadd.f32 %v285, %v1539
    %v1541 = vpop.f32.mrb[0].mxu0
    %1542 = vmatprep.mubr.bf16.mxu0 0
    %1543 = vmatmul.mubr.bf16.gmra.mrb[0].mxu0 %v1007
    %v1544 = vpop.f32.mrb[0].mxu0
    %v1545 = vadd.f32 %v285, %v1544
    %v1546 = vpop.f32.mrb[0].mxu0
    %v1547 = vpop.f32.mrb[0].mxu0
    %v1548 = vadd.f32 %v285, %v1547
    %v1549 = vpop.f32.mrb[0].mxu0
    %1550 = vmatprep.mubr.bf16.mxu0 0
    %1551 = vmatmul.mubr.bf16.gmra.mrb[0].mxu0 %v1010
    %v1552 = vpop.f32.mrb[0].mxu0
    %v1553 = vadd.f32 %v285, %v1552
    %v1554 = vpop.f32.mrb[0].mxu0
    %v1555 = vpop.f32.mrb[0].mxu0
    %v1556 = vadd.f32 %v285, %v1555
    %v1557 = vpop.f32.mrb[0].mxu0
    %1558 = vmatprep.mubr.bf16.mxu0 0
    %1559 = vmatmul.mubr.bf16.gmra.mrb[0].mxu0 %v1013
    %v1560 = vpop.f32.mrb[0].mxu0
    %v1561 = vadd.f32 %v285, %v1560
    %v1562 = vpop.f32.mrb[0].mxu0
    %v1563 = vpop.f32.mrb[0].mxu0
    %v1564 = vadd.f32 %v285, %v1563
    %v1565 = vpop.f32.mrb[0].mxu0
    %1566 = vmatprep.mubr.bf16.mxu0 0
    %1567 = vmatmul.mubr.bf16.gmra.mrb[0].mxu0 %v1016
    %v1568 = vpop.f32.mrb[0].mxu0
    %v1569 = vadd.f32 %v285, %v1568
    %v1570 = vpop.f32.mrb[0].mxu0
    %v1571 = vpop.f32.mrb[0].mxu0
    %v1572 = vadd.f32 %v285, %v1571
    %v1573 = vpop.f32.mrb[0].mxu0
    %1574 = vmatprep.mubr.bf16.mxu0 0
    %1575 = vmatmul.mubr.bf16.gmra.mrb[0].mxu0 %v1019
    %v1576 = vpop.f32.mrb[0].mxu0
    %v1577 = vadd.f32 %v285, %v1576
    %v1578 = vpop.f32.mrb[0].mxu0
    %v1579 = vpop.f32.mrb[0].mxu0
    %v1580 = vadd.f32 %v285, %v1579
    %v1581 = vpop.f32.mrb[0].mxu0
    %1582 = vmatprep.mubr.bf16.mxu0 0
    %1583 = vmatmul.mubr.bf16.gmra.mrb[0].mxu0 %v1022
    %v1584 = vpop.f32.mrb[0].mxu0
    %v1585 = vadd.f32 %v285, %v1584
    %v1586 = vpop.f32.mrb[0].mxu0
    %v1587 = vpop.f32.mrb[0].mxu0
    %v1588 = vadd.f32 %v285, %v1587
    %v1589 = vpop.f32.mrb[0].mxu0
    %1590 = vmatprep.mubr.bf16.mxu0 0
    %1591 = vmatmul.mubr.bf16.gmra.mrb[0].mxu0 %v1025
    %v1592 = vpop.f32.mrb[0].mxu0
    %v1593 = vadd.f32 %v285, %v1592
    %v1594 = vpop.f32.mrb[0].mxu0
    %v1595 = vpop.f32.mrb[0].mxu0
    %v1596 = vadd.f32 %v285, %v1595
    %v1597 = vpop.f32.mrb[0].mxu0
    %1598 = vmatprep.mubr.bf16.mxu0 0
    %1599 = vmatmul.mubr.bf16.gmra.mrb[0].mxu0 %v1028
    %v1600 = vpop.f32.mrb[0].mxu0
    %v1601 = vadd.f32 %v285, %v1600
    %v1602 = vpop.f32.mrb[0].mxu0
    %v1603 = vpop.f32.mrb[0].mxu0
    %v1604 = vadd.f32 %v285, %v1603
    %v1605 = vpop.f32.mrb[0].mxu0
    %1606 = vmatprep.mubr.bf16.mxu0 0
    %1607 = vmatmul.mubr.bf16.gmra.mrb[0].mxu0 %v1031
    %v1608 = vpop.f32.mrb[0].mxu0
    %v1609 = vadd.f32 %v285, %v1608
    %v1610 = vpop.f32.mrb[0].mxu0
    %v1611 = vpop.f32.mrb[0].mxu0
    %v1612 = vadd.f32 %v285, %v1611
    %v1613 = vpop.f32.mrb[0].mxu0
    %1614 = vmatprep.mubr.bf16.mxu0 0
    %1615 = vmatmul.mubr.bf16.gmra.mrb[0].mxu0 %v1034
    %v1616 = vpop.f32.mrb[0].mxu0
    %v1617 = vadd.f32 %v285, %v1616
    %v1618 = vpop.f32.mrb[0].mxu0
    %v1619 = vpop.f32.mrb[0].mxu0
    %v1620 = vadd.f32 %v285, %v1619
    %v1621 = vpop.f32.mrb[0].mxu0
    %1622 = vmatprep.mubr.bf16.mxu0 0
    %1623 = vmatmul.mubr.bf16.gmra.mrb[0].mxu0 %v1037
    %v1624 = vpop.f32.mrb[0].mxu0
    %v1625 = vadd.f32 %v285, %v1624
    %v1626 = vpop.f32.mrb[0].mxu0
    %v1627 = vpop.f32.mrb[0].mxu0
    %v1628 = vadd.f32 %v285, %v1627
    %v1629 = vpop.f32.mrb[0].mxu0
    %1630 = vmatprep.mubr.bf16.mxu0 0
    %1631 = vmatmul.mubr.bf16.gmra.mrb[0].mxu0 %v1040
    %v1632 = vpop.f32.mrb[0].mxu0
    %v1633 = vadd.f32 %v285, %v1632
    %v1634 = vpop.f32.mrb[0].mxu0
    %v1635 = vpop.f32.mrb[0].mxu0
    %v1636 = vadd.f32 %v285, %v1635
    %v1637 = vpop.f32.mrb[0].mxu0
    %1638 = vmatprep.mubr.bf16.mxu0 0
    %1639 = vmatmul.mubr.bf16.gmra.mrb[0].mxu0 %v1043
    %v1640 = vpop.f32.mrb[0].mxu0
    %v1641 = vadd.f32 %v285, %v1640
    %v1642 = vpop.f32.mrb[0].mxu0
    %v1643 = vpop.f32.mrb[0].mxu0
    %v1644 = vadd.f32 %v285, %v1643
    %v1645 = vpop.f32.mrb[0].mxu0
    %1646 = vmatprep.mubr.bf16.mxu0 0
    %1647 = vmatmul.mubr.bf16.gmra.mrb[0].mxu0 %v1046
    %v1648 = vpop.f32.mrb[0].mxu0
    %v1649 = vadd.f32 %v285, %v1648
    %v1650 = vpop.f32.mrb[0].mxu0
    %v1651 = vpop.f32.mrb[0].mxu0
    %v1652 = vadd.f32 %v285, %v1651
    %v1653 = vpop.f32.mrb[0].mxu0
    %1654 = vmatprep.mubr.bf16.mxu0 0
    %1655 = vmatmul.mubr.bf16.gmra.mrb[0].mxu0 %v1049
    %v1656 = vpop.f32.mrb[0].mxu0
    %v1657 = vadd.f32 %v285, %v1656
    %v1658 = vpop.f32.mrb[0].mxu0
    %v1659 = vpop.f32.mrb[0].mxu0
    %v1660 = vadd.f32 %v285, %v1659
    %v1661 = vpop.f32.mrb[0].mxu0
    %1662 = vmatprep.mubr.bf16.mxu0 0
    %1663 = vmatmul.mubr.bf16.gmra.mrb[0].mxu0 %v1052
    %v1664 = vpop.f32.mrb[0].mxu0
    %v1665 = vadd.f32 %v285, %v1664
    %v1666 = vpop.f32.mrb[0].mxu0
    %v1667 = vpop.f32.mrb[0].mxu0
    %v1668 = vadd.f32 %v285, %v1667
    %v1669 = vpop.f32.mrb[0].mxu0
    %1670 = vmatprep.mubr.bf16.mxu0 0
    %1671 = vmatmul.mubr.bf16.gmra.mrb[0].mxu0 %v1055
    %v1672 = vpop.f32.mrb[0].mxu0
    %v1673 = vadd.f32 %v285, %v1672
    %v1674 = vpop.f32.mrb[0].mxu0
    %v1675 = vpop.f32.mrb[0].mxu0
    %v1676 = vadd.f32 %v285, %v1675
    %v1677 = vpop.f32.mrb[0].mxu0
    %1678 = vmatprep.mubr.bf16.mxu0 0
    %1679 = vmatmul.mubr.bf16.gmra.mrb[0].mxu0 %v1058
    %v1680 = vpop.f32.mrb[0].mxu0
    %v1681 = vadd.f32 %v285, %v1680
    %v1682 = vpop.f32.mrb[0].mxu0
    %v1683 = vpop.f32.mrb[0].mxu0
    %v1684 = vadd.f32 %v285, %v1683
    %v1685 = vpop.f32.mrb[0].mxu0
    %1686 = vmatprep.mubr.bf16.mxu0 0
    %1687 = vmatmul.mubr.bf16.gmra.mrb[0].mxu0 %v1061
    %v1688 = vpop.f32.mrb[0].mxu0
    %v1689 = vadd.f32 %v285, %v1688
    %v1690 = vpop.f32.mrb[0].mxu0
    %v1691 = vpop.f32.mrb[0].mxu0
    %v1692 = vadd.f32 %v285, %v1691
    %v1693 = vpop.f32.mrb[0].mxu0
    %1694 = vmatprep.mubr.bf16.mxu0 0
    %1695 = vmatmul.mubr.bf16.gmra.mrb[0].mxu0 %v1064
    %v1696 = vpop.f32.mrb[0].mxu0
    %v1697 = vadd.f32 %v285, %v1696
    %v1698 = vpop.f32.mrb[0].mxu0
    %v1699 = vpop.f32.mrb[0].mxu0
    %v1700 = vadd.f32 %v285, %v1699
    %v1701 = vpop.f32.mrb[0].mxu0
    %1702 = vmatprep.mubr.bf16.mxu0 0
    %1703 = vmatmul.mubr.bf16.gmra.mrb[0].mxu0 %v1067
    %v1704 = vpop.f32.mrb[0].mxu0
    %v1705 = vadd.f32 %v285, %v1704
    %v1706 = vpop.f32.mrb[0].mxu0
    %v1707 = vpop.f32.mrb[0].mxu0
    %v1708 = vadd.f32 %v285, %v1707
    %v1709 = vpop.f32.mrb[0].mxu0
    %1710 = vmatprep.mubr.bf16.mxu0 0
    %1711 = vmatmul.mubr.bf16.gmra.mrb[0].mxu0 %v1070
    %v1712 = vpop.f32.mrb[0].mxu0
    %v1713 = vadd.f32 %v285, %v1712
    %v1714 = vpop.f32.mrb[0].mxu0
    %v1715 = vpop.f32.mrb[0].mxu0
    %v1716 = vadd.f32 %v285, %v1715
    %v1717 = vpop.f32.mrb[0].mxu0
    %1718 = vmatprep.mubr.bf16.mxu0 0
    %1719 = vmatmul.mubr.bf16.gmra.mrb[0].mxu0 %v1073
    %v1720 = vpop.f32.mrb[0].mxu0
    %v1721 = vadd.f32 %v285, %v1720
    %v1722 = vpop.f32.mrb[0].mxu0
    %v1723 = vpop.f32.mrb[0].mxu0
    %v1724 = vadd.f32 %v285, %v1723
    %v1725 = vpop.f32.mrb[0].mxu0
    %1726 = vmatprep.mubr.bf16.mxu0 0
    %1727 = vmatmul.mubr.bf16.gmra.mrb[0].mxu0 %v1076
    %v1728 = vpop.f32.mrb[0].mxu0
    %v1729 = vadd.f32 %v285, %v1728
    %v1730 = vpop.f32.mrb[0].mxu0
    %v1731 = vpop.f32.mrb[0].mxu0
    %v1732 = vadd.f32 %v285, %v1731
    %v1733 = vpop.f32.mrb[0].mxu0
    %1734 = vmatprep.mubr.bf16.mxu0 0
    %1735 = vmatmul.mubr.bf16.gmra.mrb[0].mxu0 %v1079
    %v1736 = vpop.f32.mrb[0].mxu0
    %v1737 = vadd.f32 %v285, %v1736
    %v1738 = vpop.f32.mrb[0].mxu0
    %v1739 = vpop.f32.mrb[0].mxu0
    %v1740 = vadd.f32 %v285, %v1739
    %v1741 = vpop.f32.mrb[0].mxu0
    %1742 = vmatprep.mubr.bf16.mxu0 0
    %1743 = vmatmul.mubr.bf16.gmra.mrb[0].mxu0 %v1082
    %v1744 = vpop.f32.mrb[0].mxu0
    %v1745 = vadd.f32 %v285, %v1744
    %v1746 = vpop.f32.mrb[0].mxu0
    %v1747 = vpop.f32.mrb[0].mxu0
    %v1748 = vadd.f32 %v285, %v1747
    %v1749 = vpop.f32.mrb[0].mxu0
    %1750 = vmatprep.mubr.bf16.mxu0 0
    %1751 = vmatmul.mubr.bf16.gmra.mrb[0].mxu0 %v1085
    %v1752 = vpop.f32.mrb[0].mxu0
    %v1753 = vadd.f32 %v285, %v1752
    %v1754 = vpop.f32.mrb[0].mxu0
    %v1755 = vpop.f32.mrb[0].mxu0
    %v1756 = vadd.f32 %v285, %v1755
    %v1757 = vpop.f32.mrb[0].mxu0
    %1758 = vmatprep.mubr.bf16.mxu0 0
    %1759 = vmatmul.mubr.bf16.gmra.mrb[0].mxu0 %v1088
    %v1760 = vpop.f32.mrb[0].mxu0
    %v1761 = vadd.f32 %v285, %v1760
    %v1762 = vpop.f32.mrb[0].mxu0
    %v1763 = vpop.f32.mrb[0].mxu0
    %v1764 = vadd.f32 %v285, %v1763
    %v1765 = vpop.f32.mrb[0].mxu0
    %1766 = vmatprep.mubr.bf16.mxu0 0
    %1767 = vmatmul.mubr.bf16.gmra.mrb[0].mxu0 %v1091
    %v1768 = vpop.f32.mrb[0].mxu0
    %v1769 = vadd.f32 %v285, %v1768
    %v1770 = vpop.f32.mrb[0].mxu0
    %v1771 = vpop.f32.mrb[0].mxu0
    %v1772 = vadd.f32 %v285, %v1771
    %v1773 = vpop.f32.mrb[0].mxu0
    %1774 = vmatprep.mubr.bf16.mxu0 0
    %1775 = vmatmul.mubr.bf16.gmra.mrb[0].mxu0 %v1094
    %v1776 = vpop.f32.mrb[0].mxu0
    %v1777 = vadd.f32 %v285, %v1776
    %v1778 = vpop.f32.mrb[0].mxu0
    %v1779 = vpop.f32.mrb[0].mxu0
    %v1780 = vadd.f32 %v285, %v1779
    %v1781 = vpop.f32.mrb[0].mxu0
    %1782 = vmatprep.mubr.bf16.mxu0 0
    %1783 = vmatmul.mubr.bf16.gmra.mrb[0].mxu0 %v1097
    %v1784 = vpop.f32.mrb[0].mxu0
    %v1785 = vadd.f32 %v285, %v1784
    %v1786 = vpop.f32.mrb[0].mxu0
    %v1787 = vpop.f32.mrb[0].mxu0
    %v1788 = vadd.f32 %v285, %v1787
    %v1789 = vpop.f32.mrb[0].mxu0
    %1790 = vmatprep.mubr.bf16.mxu0 0
    %1791 = vmatmul.mubr.bf16.gmra.mrb[0].mxu0 %v1100
    %v1792 = vpop.f32.mrb[0].mxu0
    %v1793 = vadd.f32 %v285, %v1792
    %v1794 = vpop.f32.mrb[0].mxu0
    %v1795 = vpop.f32.mrb[0].mxu0
    %v1796 = vadd.f32 %v285, %v1795
    %v1797 = vpop.f32.mrb[0].mxu0
    %1798 = vmatprep.mubr.bf16.mxu0 0
    %1799 = vmatmul.mubr.bf16.gmra.mrb[0].mxu0 %v1103
    %v1800 = vpop.f32.mrb[0].mxu0
    %v1801 = vadd.f32 %v285, %v1800
    %v1802 = vpop.f32.mrb[0].mxu0
    %v1803 = vpop.f32.mrb[0].mxu0
    %v1804 = vadd.f32 %v285, %v1803
    %v1805 = vpop.f32.mrb[0].mxu0
    %1806 = vmatprep.mubr.bf16.mxu0 0
    %1807 = vmatmul.mubr.bf16.gmra.mrb[0].mxu0 %v1106
    %v1808 = vpop.f32.mrb[0].mxu0
    %v1809 = vadd.f32 %v285, %v1808
    %v1810 = vpop.f32.mrb[0].mxu0
    %v1811 = vpop.f32.mrb[0].mxu0
    %v1812 = vadd.f32 %v285, %v1811
    %v1813 = vpop.f32.mrb[0].mxu0
    %1814 = vmatprep.mubr.bf16.mxu0 0
    %1815 = vmatmul.mubr.bf16.gmra.mrb[0].mxu0 %v1109
    %v1816 = vpop.f32.mrb[0].mxu0
    %v1817 = vadd.f32 %v285, %v1816
    %v1818 = vpop.f32.mrb[0].mxu0
    %v1819 = vpop.f32.mrb[0].mxu0
    %v1820 = vadd.f32 %v285, %v1819
    %v1821 = vpop.f32.mrb[0].mxu0
    %1822 = vmatprep.mubr.bf16.mxu0 0
    %1823 = vmatmul.mubr.bf16.gmra.mrb[0].mxu0 %v1112
    %v1824 = vpop.f32.mrb[0].mxu0
    %v1825 = vadd.f32 %v285, %v1824
    %v1826 = vpop.f32.mrb[0].mxu0
    %v1827 = vpop.f32.mrb[0].mxu0
    %v1828 = vadd.f32 %v285, %v1827
    %v1829 = vpop.f32.mrb[0].mxu0
    %1830 = vmatprep.mubr.bf16.mxu0 0
    %1831 = vmatmul.mubr.bf16.gmra.mrb[0].mxu0 %v1115
    %v1832 = vpop.f32.mrb[0].mxu0
    %v1833 = vadd.f32 %v285, %v1832
    %v1834 = vpop.f32.mrb[0].mxu0
    %v1835 = vpop.f32.mrb[0].mxu0
    %v1836 = vadd.f32 %v285, %v1835
    %v1837 = vpop.f32.mrb[0].mxu0
    %1838 = vmatprep.mubr.bf16.mxu0 0
    %1839 = vmatmul.mubr.bf16.gmra.mrb[0].mxu0 %v1118
    %v1840 = vpop.f32.mrb[0].mxu0
    %v1841 = vadd.f32 %v285, %v1840
    %v1842 = vpop.f32.mrb[0].mxu0
    %v1843 = vpop.f32.mrb[0].mxu0
    %v1844 = vadd.f32 %v285, %v1843
    %v1845 = vpop.f32.mrb[0].mxu0
    %1846 = vmatprep.mubr.bf16.mxu0 0
    %1847 = vmatmul.mubr.bf16.gmra.mrb[0].mxu0 %v1121
    %v1848 = vpop.f32.mrb[0].mxu0
    %v1849 = vadd.f32 %v285, %v1848
    %v1850 = vpop.f32.mrb[0].mxu0
    %v1851 = vpop.f32.mrb[0].mxu0
    %v1852 = vadd.f32 %v285, %v1851
    %v1853 = vpop.f32.mrb[0].mxu0
    %1854 = vmatprep.mubr.bf16.mxu0 0
    %1855 = vmatmul.mubr.bf16.gmra.mrb[0].mxu0 %v1124
    %v1856 = vpop.f32.mrb[0].mxu0
    %v1857 = vadd.f32 %v285, %v1856
    %v1858 = vpop.f32.mrb[0].mxu0
    %v1859 = vpop.f32.mrb[0].mxu0
    %v1860 = vadd.f32 %v285, %v1859
    %v1861 = vpop.f32.mrb[0].mxu0
    %1862 = vmatprep.mubr.bf16.mxu0 0
    %1863 = vmatmul.mubr.bf16.gmra.mrb[0].mxu0 %v1127
    %v1864 = vpop.f32.mrb[0].mxu0
    %v1865 = vadd.f32 %v285, %v1864
    %v1866 = vpop.f32.mrb[0].mxu0
    %v1867 = vpop.f32.mrb[0].mxu0
    %v1868 = vadd.f32 %v285, %v1867
    %v1869 = vpop.f32.mrb[0].mxu0
    %1870 = vmatprep.mubr.bf16.mxu0 0
    %1871 = vmatmul.mubr.bf16.gmra.mrb[0].mxu0 %v1130
    %v1872 = vpop.f32.mrb[0].mxu0
    %v1873 = vadd.f32 %v285, %v1872
    %v1874 = vpop.f32.mrb[0].mxu0
    %v1875 = vpop.f32.mrb[0].mxu0
    %v1876 = vadd.f32 %v285, %v1875
    %v1877 = vpop.f32.mrb[0].mxu0
    %1878 = vmatprep.mubr.bf16.mxu0 0
    %1879 = vmatmul.mubr.bf16.gmra.mrb[0].mxu0 %v1133
    %v1880 = vpop.f32.mrb[0].mxu0
    %v1881 = vadd.f32 %v285, %v1880
    %v1882 = vpop.f32.mrb[0].mxu0
    %v1883 = vpop.f32.mrb[0].mxu0
    %v1884 = vadd.f32 %v285, %v1883
    %v1885 = vpop.f32.mrb[0].mxu0
    %1886 = vmatprep.mubr.bf16.mxu0 0
    %1887 = vmatmul.mubr.bf16.gmra.mrb[0].mxu0 %v1136
    %v1888 = vpop.f32.mrb[0].mxu0
    %v1889 = vadd.f32 %v285, %v1888
    %v1890 = vpop.f32.mrb[0].mxu0
    %v1891 = vpop.f32.mrb[0].mxu0
    %v1892 = vadd.f32 %v285, %v1891
    %v1893 = vpop.f32.mrb[0].mxu0
    %1894 = vmatprep.mubr.bf16.mxu0 0
    %1895 = vmatmul.mubr.bf16.gmra.mrb[0].mxu0 %v1139
    %v1896 = vpop.f32.mrb[0].mxu0
    %v1897 = vadd.f32 %v285, %v1896
    %v1898 = vpop.f32.mrb[0].mxu0
    %v1899 = vpop.f32.mrb[0].mxu0
    %v1900 = vadd.f32 %v285, %v1899
    %v1901 = vpop.f32.mrb[0].mxu0
    %1902 = vmatprep.mubr.bf16.mxu0 0
    %1903 = vmatmul.mubr.bf16.gmra.mrb[0].mxu0 %v1142
    %v1904 = vpop.f32.mrb[0].mxu0
    %v1905 = vadd.f32 %v285, %v1904
    %v1906 = vpop.f32.mrb[0].mxu0
    %v1907 = vpop.f32.mrb[0].mxu0
    %v1908 = vadd.f32 %v285, %v1907
    %v1909 = vpop.f32.mrb[0].mxu0
    %1910 = vmatprep.mubr.bf16.mxu0 0
    %1911 = vmatmul.mubr.bf16.gmra.mrb[0].mxu0 %v1145
    %v1912 = vpop.f32.mrb[0].mxu0
    %v1913 = vadd.f32 %v285, %v1912
    %v1914 = vpop.f32.mrb[0].mxu0
    %v1915 = vpop.f32.mrb[0].mxu0
    %v1916 = vadd.f32 %v285, %v1915
    %v1917 = vpop.f32.mrb[0].mxu0
    %1918 = vmatprep.mubr.bf16.mxu0 0
    %1919 = vmatmul.mubr.bf16.gmra.mrb[0].mxu0 %v1148
    %v1920 = vpop.f32.mrb[0].mxu0
    %v1921 = vadd.f32 %v285, %v1920
    %v1922 = vpop.f32.mrb[0].mxu0
    %v1923 = vpop.f32.mrb[0].mxu0
    %v1924 = vadd.f32 %v285, %v1923
    %v1925 = vpop.f32.mrb[0].mxu0
    %1926 = vmatprep.mubr.bf16.mxu0 0
    %1927 = vmatmul.mubr.bf16.gmra.mrb[0].mxu0 %v1151
    %v1928 = vpop.f32.mrb[0].mxu0
    %v1929 = vadd.f32 %v285, %v1928
    %v1930 = vpop.f32.mrb[0].mxu0
    %v1931 = vpop.f32.mrb[0].mxu0
    %v1932 = vadd.f32 %v285, %v1931
    %v1933 = vpop.f32.mrb[0].mxu0
    %1934 = vmatprep.mubr.bf16.mxu0 0
    %1935 = vmatmul.mubr.bf16.gmra.mrb[0].mxu0 %v1154
    %v1936 = vpop.f32.mrb[0].mxu0
    %v1937 = vadd.f32 %v285, %v1936
    %v1938 = vpop.f32.mrb[0].mxu0
    %v1939 = vpop.f32.mrb[0].mxu0
    %v1940 = vadd.f32 %v285, %v1939
    %v1941 = vpop.f32.mrb[0].mxu0
    %1942 = vmatprep.mubr.bf16.mxu0 0
    %1943 = vmatmul.mubr.bf16.gmra.mrb[0].mxu0 %v1157
    %v1944 = vpop.f32.mrb[0].mxu0
    %v1945 = vadd.f32 %v285, %v1944
    %v1946 = vpop.f32.mrb[0].mxu0
    %v1947 = vpop.f32.mrb[0].mxu0
    %v1948 = vadd.f32 %v285, %v1947
    %v1949 = vpop.f32.mrb[0].mxu0
    %1950 = vmatprep.mubr.bf16.mxu0 0
    %1951 = vmatmul.mubr.bf16.gmra.mrb[0].mxu0 %v1160
    %v1952 = vpop.f32.mrb[0].mxu0
    %v1953 = vadd.f32 %v285, %v1952
    %v1954 = vpop.f32.mrb[0].mxu0
    %v1955 = vpop.f32.mrb[0].mxu0
    %v1956 = vadd.f32 %v285, %v1955
    %v1957 = vpop.f32.mrb[0].mxu0
    %1958 = vmatprep.mubr.bf16.mxu0 0
    %1959 = vmatmul.mubr.bf16.gmra.mrb[0].mxu0 %v1163
    %v1960 = vpop.f32.mrb[0].mxu0
    %v1961 = vadd.f32 %v285, %v1960
    %v1962 = vpop.f32.mrb[0].mxu0
    %v1963 = vpop.f32.mrb[0].mxu0
    %v1964 = vadd.f32 %v285, %v1963
    %v1965 = vpop.f32.mrb[0].mxu0
    %1966 = vmatprep.mubr.bf16.mxu0 0
    %1967 = vmatmul.mubr.bf16.gmra.mrb[0].mxu0 %v1166
    %v1968 = vpop.f32.mrb[0].mxu0
    %v1969 = vadd.f32 %v285, %v1968
    %v1970 = vpop.f32.mrb[0].mxu0
    %v1971 = vpop.f32.mrb[0].mxu0
    %v1972 = vadd.f32 %v285, %v1971
    %v1973 = vpop.f32.mrb[0].mxu0
    %1974 = vmatprep.mubr.bf16.mxu0 0
    %1975 = vmatmul.mubr.bf16.gmra.mrb[0].mxu0 %v1169
    %v1976 = vpop.f32.mrb[0].mxu0
    %v1977 = vadd.f32 %v285, %v1976
    %v1978 = vpop.f32.mrb[0].mxu0
    %v1979 = vpop.f32.mrb[0].mxu0
    %v1980 = vadd.f32 %v285, %v1979
    %v1981 = vpop.f32.mrb[0].mxu0
    %1982 = vmatprep.mubr.bf16.mxu0 0
    %1983 = vmatmul.mubr.bf16.gmra.mrb[0].mxu0 %v1172
    %v1984 = vpop.f32.mrb[0].mxu0
    %v1985 = vadd.f32 %v285, %v1984
    %v1986 = vpop.f32.mrb[0].mxu0
    %v1987 = vpop.f32.mrb[0].mxu0
    %v1988 = vadd.f32 %v285, %v1987
    %v1989 = vpop.f32.mrb[0].mxu0
    %1990 = vmatprep.mubr.bf16.mxu0 0
    %1991 = vmatmul.mubr.bf16.gmra.mrb[0].mxu0 %v1175
    %v1992 = vpop.f32.mrb[0].mxu0
    %v1993 = vadd.f32 %v285, %v1992
    %v1994 = vpop.f32.mrb[0].mxu0
    %v1995 = vpop.f32.mrb[0].mxu0
    %v1996 = vadd.f32 %v285, %v1995
    %v1997 = vpop.f32.mrb[0].mxu0
    %1998 = vmatprep.mubr.bf16.mxu0 0
    %1999 = vmatmul.mubr.bf16.gmra.mrb[0].mxu0 %v1178
    %v2000 = vpop.f32.mrb[0].mxu0
    %v2001 = vadd.f32 %v285, %v2000
    %v2002 = vpop.f32.mrb[0].mxu0
    %v2003 = vpop.f32.mrb[0].mxu0
    %v2004 = vadd.f32 %v285, %v2003
    %v2005 = vpop.f32.mrb[0].mxu0
    %2006 = vmatprep.mubr.bf16.mxu0 0
    %2007 = vmatmul.mubr.bf16.gmra.mrb[0].mxu0 %v1181
    %v2008 = vpop.f32.mrb[0].mxu0
    %v2009 = vadd.f32 %v285, %v2008
    %v2010 = vpop.f32.mrb[0].mxu0
    %v2011 = vpop.f32.mrb[0].mxu0
    %v2012 = vadd.f32 %v285, %v2011
    %v2013 = vpop.f32.mrb[0].mxu0
    %2014 = vmatprep.mubr.bf16.mxu0 0
    %2015 = vmatmul.mubr.bf16.gmra.mrb[0].mxu0 %v1184
    %v2016 = vpop.f32.mrb[0].mxu0
    %v2017 = vadd.f32 %v285, %v2016
    %v2018 = vpop.f32.mrb[0].mxu0
    %v2019 = vpop.f32.mrb[0].mxu0
    %v2020 = vadd.f32 %v285, %v2019
    %v2021 = vpop.f32.mrb[0].mxu0
    %2022 = vmatprep.mubr.bf16.mxu0 0
    %2023 = vmatmul.mubr.bf16.gmra.mrb[0].mxu0 %v1187
    %v2024 = vpop.f32.mrb[0].mxu0
    %v2025 = vadd.f32 %v285, %v2024
    %v2026 = vpop.f32.mrb[0].mxu0
    %v2027 = vpop.f32.mrb[0].mxu0
    %v2028 = vadd.f32 %v285, %v2027
    %v2029 = vpop.f32.mrb[0].mxu0
    %2030 = vmatprep.mubr.bf16.mxu0 0
    %2031 = vmatmul.mubr.bf16.gmra.mrb[0].mxu0 %v1190
    %v2032 = vpop.f32.mrb[0].mxu0
    %v2033 = vadd.f32 %v285, %v2032
    %v2034 = vpop.f32.mrb[0].mxu0
    %v2035 = vpop.f32.mrb[0].mxu0
    %v2036 = vadd.f32 %v285, %v2035
    %v2037 = vpop.f32.mrb[0].mxu0
    %2038 = vmatprep.mubr.bf16.mxu0 0
    %2039 = vmatmul.mubr.bf16.gmra.mrb[0].mxu0 %v1193
    %v2040 = vpop.f32.mrb[0].mxu0
    %v2041 = vadd.f32 %v285, %v2040
    %v2042 = vpop.f32.mrb[0].mxu0
    %v2043 = vpop.f32.mrb[0].mxu0
    %v2044 = vadd.f32 %v285, %v2043
    %v2045 = vpop.f32.mrb[0].mxu0
    %2046 = vmatprep.mubr.bf16.mxu0 0
    %2047 = vmatmul.mubr.bf16.gmra.mrb[0].mxu0 %v1196
    %v2048 = vpop.f32.mrb[0].mxu0
    %v2049 = vadd.f32 %v285, %v2048
    %v2050 = vpop.f32.mrb[0].mxu0
    %v2051 = vpop.f32.mrb[0].mxu0
    %v2052 = vadd.f32 %v285, %v2051
    %v2053 = vpop.f32.mrb[0].mxu0
    %2054 = vmatprep.mubr.bf16.mxu0 0
    %2055 = vmatmul.mubr.bf16.gmra.mrb[0].mxu0 %v1199
    %v2056 = vpop.f32.mrb[0].mxu0
    %v2057 = vadd.f32 %v285, %v2056
    %v2058 = vpop.f32.mrb[0].mxu0
    %v2059 = vpop.f32.mrb[0].mxu0
    %v2060 = vadd.f32 %v285, %v2059
    %v2061 = vpop.f32.mrb[0].mxu0
    %2062 = vmatprep.mubr.bf16.mxu0 0
    %2063 = vmatmul.mubr.bf16.gmra.mrb[0].mxu0 %v1202
    %v2064 = vpop.f32.mrb[0].mxu0
    %v2065 = vadd.f32 %v285, %v2064
    %v2066 = vpop.f32.mrb[0].mxu0
    %v2067 = vpop.f32.mrb[0].mxu0
    %v2068 = vadd.f32 %v285, %v2067
    %v2069 = vpop.f32.mrb[0].mxu0
    %2070 = vmatprep.mubr.bf16.mxu0 0
    %2071 = vmatmul.mubr.bf16.gmra.mrb[0].mxu0 %v1205
    %v2072 = vpop.f32.mrb[0].mxu0
    %v2073 = vadd.f32 %v285, %v2072
    %v2074 = vpop.f32.mrb[0].mxu0
    %v2075 = vpop.f32.mrb[0].mxu0
    %v2076 = vadd.f32 %v285, %v2075
    %v2077 = vpop.f32.mrb[0].mxu0
    %2078 = vmatprep.mubr.bf16.mxu0 0
    %2079 = vmatmul.mubr.bf16.gmra.mrb[0].mxu0 %v1208
    %v2080 = vpop.f32.mrb[0].mxu0
    %v2081 = vadd.f32 %v285, %v2080
    %v2082 = vpop.f32.mrb[0].mxu0
    %v2083 = vpop.f32.mrb[0].mxu0
    %v2084 = vadd.f32 %v285, %v2083
    %v2085 = vpop.f32.mrb[0].mxu0
    %2086 = vmatprep.mubr.bf16.mxu0 0
    %2087 = vmatmul.mubr.bf16.gmra.mrb[0].mxu0 %v1211
    %v2088 = vpop.f32.mrb[0].mxu0
    %v2089 = vadd.f32 %v285, %v2088
    %v2090 = vpop.f32.mrb[0].mxu0
    %v2091 = vpop.f32.mrb[0].mxu0
    %v2092 = vadd.f32 %v285, %v2091
    %v2093 = vpop.f32.mrb[0].mxu0
    %2094 = vmatprep.mubr.bf16.mxu0 0
    %2095 = vmatmul.mubr.bf16.gmra.mrb[0].mxu0 %v1214
    %v2096 = vpop.f32.mrb[0].mxu0
    %v2097 = vadd.f32 %v285, %v2096
    %v2098 = vpop.f32.mrb[0].mxu0
    %v2099 = vpop.f32.mrb[0].mxu0
    %v2100 = vadd.f32 %v285, %v2099
    %v2101 = vpop.f32.mrb[0].mxu0
    %2102 = vmatprep.mubr.bf16.mxu0 0
    %2103 = vmatmul.mubr.bf16.gmra.mrb[0].mxu0 %v1217
    %v2104 = vpop.f32.mrb[0].mxu0
    %v2105 = vadd.f32 %v285, %v2104
    %v2106 = vpop.f32.mrb[0].mxu0
    %v2107 = vpop.f32.mrb[0].mxu0
    %v2108 = vadd.f32 %v285, %v2107
    %v2109 = vpop.f32.mrb[0].mxu0
    %2110 = vmatprep.mubr.bf16.mxu0 0
    %2111 = vmatmul.mubr.bf16.gmra.mrb[0].mxu0 %v1220
    %v2112 = vpop.f32.mrb[0].mxu0
    %v2113 = vadd.f32 %v285, %v2112
    %v2114 = vpop.f32.mrb[0].mxu0
    %v2115 = vpop.f32.mrb[0].mxu0
    %v2116 = vadd.f32 %v285, %v2115
    %v2117 = vpop.f32.mrb[0].mxu0
    %2118 = vmatprep.mubr.bf16.mxu0 0
    %2119 = vmatmul.mubr.bf16.gmra.mrb[0].mxu0 %v1223
    %v2120 = vpop.f32.mrb[0].mxu0
    %v2121 = vadd.f32 %v285, %v2120
    %v2122 = vpop.f32.mrb[0].mxu0
    %v2123 = vpop.f32.mrb[0].mxu0
    %v2124 = vadd.f32 %v285, %v2123
    %v2125 = vpop.f32.mrb[0].mxu0
    %2126 = vmatprep.mubr.bf16.mxu0 0
    %2127 = vmatmul.mubr.bf16.gmra.mrb[0].mxu0 %v1226
    %v2128 = vpop.f32.mrb[0].mxu0
    %v2129 = vadd.f32 %v285, %v2128
    %v2130 = vpop.f32.mrb[0].mxu0
    %v2131 = vpop.f32.mrb[0].mxu0
    %v2132 = vadd.f32 %v285, %v2131
    %v2133 = vpop.f32.mrb[0].mxu0
    %2134 = vmatprep.mubr.bf16.mxu0 0
    %2135 = vmatmul.mubr.bf16.gmra.mrb[0].mxu0 %v1229
    %v2136 = vpop.f32.mrb[0].mxu0
    %v2137 = vadd.f32 %v285, %v2136
    %v2138 = vpop.f32.mrb[0].mxu0
    %v2139 = vpop.f32.mrb[0].mxu0
    %v2140 = vadd.f32 %v285, %v2139
    %v2141 = vpop.f32.mrb[0].mxu0
    %2142 = vmatprep.mubr.bf16.mxu0 0
    %2143 = vmatmul.mubr.bf16.gmra.mrb[0].mxu0 %v1232
    %v2144 = vpop.f32.mrb[0].mxu0
    %v2145 = vadd.f32 %v285, %v2144
    %v2146 = vpop.f32.mrb[0].mxu0
    %v2147 = vpop.f32.mrb[0].mxu0
    %v2148 = vadd.f32 %v285, %v2147
    %v2149 = vpop.f32.mrb[0].mxu0
    %2150 = vmatprep.mubr.bf16.mxu0 0
    %2151 = vmatmul.mubr.bf16.gmra.mrb[0].mxu0 %v1235
    %v2152 = vpop.f32.mrb[0].mxu0
    %v2153 = vadd.f32 %v285, %v2152
    %v2154 = vpop.f32.mrb[0].mxu0
    %v2155 = vpop.f32.mrb[0].mxu0
    %v2156 = vadd.f32 %v285, %v2155
    %v2157 = vpop.f32.mrb[0].mxu0
    %2158 = vmatprep.mubr.bf16.mxu0 0
    %2159 = vmatmul.mubr.bf16.gmra.mrb[0].mxu0 %v1238
    %v2160 = vpop.f32.mrb[0].mxu0
    %v2161 = vadd.f32 %v285, %v2160
    %v2162 = vpop.f32.mrb[0].mxu0
    %v2163 = vpop.f32.mrb[0].mxu0
    %v2164 = vadd.f32 %v285, %v2163
    %v2165 = vpop.f32.mrb[0].mxu0
    %2166 = vmatprep.mubr.bf16.mxu0 0
    %2167 = vmatmul.mubr.bf16.gmra.mrb[0].mxu0 %v1241
    %v2168 = vpop.f32.mrb[0].mxu0
    %v2169 = vadd.f32 %v285, %v2168
    %v2170 = vpop.f32.mrb[0].mxu0
    %v2171 = vpop.f32.mrb[0].mxu0
    %v2172 = vadd.f32 %v285, %v2171
    %v2173 = vpop.f32.mrb[0].mxu0
    %2174 = vmatprep.mubr.bf16.mxu0 0
    %2175 = vmatmul.mubr.bf16.gmra.mrb[0].mxu0 %v1244
    %v2176 = vpop.f32.mrb[0].mxu0
    %v2177 = vadd.f32 %v285, %v2176
    %v2178 = vpop.f32.mrb[0].mxu0
    %v2179 = vpop.f32.mrb[0].mxu0
    %v2180 = vadd.f32 %v285, %v2179
    %v2181 = vpop.f32.mrb[0].mxu0
    %2182 = vmatprep.mubr.bf16.mxu0 0
    %2183 = vmatmul.mubr.bf16.gmra.mrb[0].mxu0 %v1247
    %v2184 = vpop.f32.mrb[0].mxu0
    %v2185 = vadd.f32 %v285, %v2184
    %v2186 = vpop.f32.mrb[0].mxu0
    %v2187 = vpop.f32.mrb[0].mxu0
    %v2188 = vadd.f32 %v285, %v2187
    %v2189 = vpop.f32.mrb[0].mxu0
    %2190 = vmatprep.mubr.bf16.mxu0 0
    %2191 = vmatmul.mubr.bf16.gmra.mrb[0].mxu0 %v1250
    %v2192 = vpop.f32.mrb[0].mxu0
    %v2193 = vadd.f32 %v285, %v2192
    %v2194 = vpop.f32.mrb[0].mxu0
    %v2195 = vpop.f32.mrb[0].mxu0
    %v2196 = vadd.f32 %v285, %v2195
    %v2197 = vpop.f32.mrb[0].mxu0
    %2198 = vmatprep.mubr.bf16.mxu0 0
    %2199 = vmatmul.mubr.bf16.gmra.mrb[0].mxu0 %v1253
    %v2200 = vpop.f32.mrb[0].mxu0
    %v2201 = vadd.f32 %v285, %v2200
    %v2202 = vpop.f32.mrb[0].mxu0
    %v2203 = vpop.f32.mrb[0].mxu0
    %v2204 = vadd.f32 %v285, %v2203
    %v2205 = vpop.f32.mrb[0].mxu0
    %2206 = vmatprep.mubr.bf16.mxu0 0
    %2207 = vmatmul.mubr.bf16.gmra.mrb[0].mxu0 %v1256
    %v2208 = vpop.f32.mrb[0].mxu0
    %v2209 = vadd.f32 %v285, %v2208
    %v2210 = vpop.f32.mrb[0].mxu0
    %v2211 = vpop.f32.mrb[0].mxu0
    %v2212 = vadd.f32 %v285, %v2211
    %v2213 = vpop.f32.mrb[0].mxu0
    %2214 = vmatprep.mubr.bf16.mxu0 0
    %2215 = vmatmul.mubr.bf16.gmra.mrb[0].mxu0 %v1259
    %v2216 = vpop.f32.mrb[0].mxu0
    %v2217 = vadd.f32 %v285, %v2216
    %v2218 = vpop.f32.mrb[0].mxu0
    %v2219 = vpop.f32.mrb[0].mxu0
    %v2220 = vadd.f32 %v285, %v2219
    %v2221 = vpop.f32.mrb[0].mxu0
    %2222 = vmatprep.mubr.bf16.mxu0 0
    %2223 = vmatmul.mubr.bf16.gmra.mrb[0].mxu0 %v1262
    %v2224 = vpop.f32.mrb[0].mxu0
    %v2225 = vadd.f32 %v285, %v2224
    %v2226 = vpop.f32.mrb[0].mxu0
    %v2227 = vpop.f32.mrb[0].mxu0
    %v2228 = vadd.f32 %v285, %v2227
    %v2229 = vpop.f32.mrb[0].mxu0
    %2230 = vmatprep.mubr.bf16.mxu0 0
    %2231 = vmatmul.mubr.bf16.gmra.mrb[0].mxu0 %v1265
    %v2232 = vpop.f32.mrb[0].mxu0
    %v2233 = vadd.f32 %v285, %v2232
    %v2234 = vpop.f32.mrb[0].mxu0
    %v2235 = vpop.f32.mrb[0].mxu0
    %v2236 = vadd.f32 %v285, %v2235
    %v2237 = vpop.f32.mrb[0].mxu0
    %2238 = vmatprep.mubr.bf16.mxu0 0
    %2239 = vmatmul.mubr.bf16.gmra.mrb[0].mxu0 %v1268
    %v2240 = vpop.f32.mrb[0].mxu0
    %v2241 = vadd.f32 %v285, %v2240
    %v2242 = vpop.f32.mrb[0].mxu0
    %v2243 = vpop.f32.mrb[0].mxu0
    %v2244 = vadd.f32 %v285, %v2243
    %v2245 = vpop.f32.mrb[0].mxu0
    %2246 = vmatprep.mubr.bf16.mxu0 0
    %2247 = vmatmul.mubr.bf16.gmra.mrb[0].mxu0 %v1271
    %v2248 = vpop.f32.mrb[0].mxu0
    %v2249 = vadd.f32 %v285, %v2248
    %v2250 = vpop.f32.mrb[0].mxu0
    %v2251 = vpop.f32.mrb[0].mxu0
    %v2252 = vadd.f32 %v285, %v2251
    %v2253 = vpop.f32.mrb[0].mxu0
    %2254 = vmatprep.mubr.bf16.mxu0 0
    %2255 = vmatmul.mubr.bf16.gmra.mrb[0].mxu0 %v1274
    %v2256 = vpop.f32.mrb[0].mxu0
    %v2257 = vadd.f32 %v285, %v2256
    %v2258 = vpop.f32.mrb[0].mxu0
    %v2259 = vpop.f32.mrb[0].mxu0
    %v2260 = vadd.f32 %v285, %v2259
    %v2261 = vpop.f32.mrb[0].mxu0
    %2262 = vmatprep.mubr.bf16.mxu0 0
    %2263 = vmatmul.mubr.bf16.gmra.mrb[0].mxu0 %v1277
    %v2264 = vpop.f32.mrb[0].mxu0
    %v2265 = vadd.f32 %v285, %v2264
    %v2266 = vpop.f32.mrb[0].mxu0
    %v2267 = vpop.f32.mrb[0].mxu0
    %v2268 = vadd.f32 %v285, %v2267
    %v2269 = vpop.f32.mrb[0].mxu0
    %2270 = vmatprep.mubr.bf16.mxu0 0
    %2271 = vmatmul.mubr.bf16.gmra.mrb[0].mxu0 %v1280
    %v2272 = vpop.f32.mrb[0].mxu0
    %v2273 = vadd.f32 %v285, %v2272
    %v2274 = vpop.f32.mrb[0].mxu0
    %v2275 = vpop.f32.mrb[0].mxu0
    %v2276 = vadd.f32 %v285, %v2275
    %v2277 = vpop.f32.mrb[0].mxu0
    %2278 = vmatprep.mubr.bf16.mxu0 0
    %2279 = vmatmul.mubr.bf16.gmra.mrb[0].mxu0 %v1283
    %v2280 = vpop.f32.mrb[0].mxu0
    %v2281 = vadd.f32 %v285, %v2280
    %v2282 = vpop.f32.mrb[0].mxu0
    %v2283 = vpop.f32.mrb[0].mxu0
    %v2284 = vadd.f32 %v285, %v2283
    %v2285 = vpop.f32.mrb[0].mxu0
    %2286 = vmatprep.mubr.bf16.mxu0 0
    %2287 = vmatmul.mubr.bf16.gmra.mrb[0].mxu0 %v1286
    %v2288 = vpop.f32.mrb[0].mxu0
    %v2289 = vadd.f32 %v285, %v2288
    %v2290 = vpop.f32.mrb[0].mxu0
    %v2291 = vpop.f32.mrb[0].mxu0
    %v2292 = vadd.f32 %v285, %v2291
    %v2293 = vpop.f32.mrb[0].mxu0
    %2294 = vmatprep.mubr.bf16.mxu0 0
    %2295 = vmatmul.mubr.bf16.gmra.mrb[0].mxu0 %v1289
    %v2296 = vpop.f32.mrb[0].mxu0
    %v2297 = vadd.f32 %v285, %v2296
    %v2298 = vpop.f32.mrb[0].mxu0
    %v2299 = vpop.f32.mrb[0].mxu0
    %v2300 = vadd.f32 %v285, %v2299
    %v2301 = vpop.f32.mrb[0].mxu0
    %2302 = vmatprep.mubr.bf16.mxu0 0
    %2303 = vmatmul.mubr.bf16.gmra.mrb[0].mxu0 %v1292
    %v2304 = vpop.f32.mrb[0].mxu0
    %v2305 = vadd.f32 %v285, %v2304
    %v2306 = vpop.f32.mrb[0].mxu0
    %v2307 = vpop.f32.mrb[0].mxu0
    %v2308 = vadd.f32 %v285, %v2307
    %v2309 = vpop.f32.mrb[0].mxu0
    %2310 = vmatprep.mubr.bf16.mxu0 0
    %2311 = vmatmul.mubr.bf16.gmra.mrb[0].mxu0 %v1295
    %v2312 = vpop.f32.mrb[0].mxu0
    %v2313 = vadd.f32 %v285, %v2312
    %v2314 = vpop.f32.mrb[0].mxu0
    %v2315 = vpop.f32.mrb[0].mxu0
    %v2316 = vadd.f32 %v285, %v2315
    %v2317 = vpop.f32.mrb[0].mxu0
    %2318 = vmatprep.mubr.bf16.mxu0 0
    %2319 = vmatmul.mubr.bf16.gmra.mrb[0].mxu0 %v1298
    %v2320 = vpop.f32.mrb[0].mxu0
    %v2321 = vadd.f32 %v285, %v2320
    %v2322 = vpop.f32.mrb[0].mxu0
    %v2323 = vpop.f32.mrb[0].mxu0
    %v2324 = vadd.f32 %v285, %v2323
    %v2325 = vpop.f32.mrb[0].mxu0
    %2326 = vmatprep.mubr.bf16.mxu0 0
    %2327 = vmatmul.mubr.bf16.gmra.mrb[0].mxu0 %v1301
    %v2328 = vpop.f32.mrb[0].mxu0
    %v2329 = vadd.f32 %v285, %v2328
    %v2330 = vpop.f32.mrb[0].mxu0
    %v2331 = vpop.f32.mrb[0].mxu0
    %v2332 = vadd.f32 %v285, %v2331
    %v2333 = vpop.f32.mrb[0].mxu0
    %2334 = vmatprep.mubr.bf16.mxu0 0
    %2335 = vmatmul.mubr.bf16.gmra.mrb[0].mxu0 %v1304
    %v2336 = vpop.f32.mrb[0].mxu0
    %v2337 = vadd.f32 %v285, %v2336
    %v2338 = vpop.f32.mrb[0].mxu0
    %v2339 = vpop.f32.mrb[0].mxu0
    %v2340 = vadd.f32 %v285, %v2339
    %v2341 = vpop.f32.mrb[0].mxu0
    %2342 = vmatprep.mubr.bf16.mxu0 0
    %2343 = vmatmul.mubr.bf16.gmra.mrb[0].mxu0 %v1307
    %v2344 = vpop.f32.mrb[0].mxu0
    %v2345 = vadd.f32 %v285, %v2344
    %v2346 = vpop.f32.mrb[0].mxu0
    %v2347 = vpop.f32.mrb[0].mxu0
    %v2348 = vadd.f32 %v285, %v2347
    %v2349 = vpop.f32.mrb[0].mxu0
    %2350 = vmatprep.mubr.bf16.mxu0 0
    %2351 = vmatmul.mubr.bf16.gmra.mrb[0].mxu0 %v1310
    %v2352 = vpop.f32.mrb[0].mxu0
    %v2353 = vadd.f32 %v285, %v2352
    %v2354 = vpop.f32.mrb[0].mxu0
    %v2355 = vpop.f32.mrb[0].mxu0
    %v2356 = vadd.f32 %v285, %v2355
    %v2357 = vpop.f32.mrb[0].mxu0
    %2358 = vmatprep.mubr.bf16.mxu0 0
    %2359 = vmatmul.mubr.bf16.gmra.mrb[0].mxu0 %v1313
    %v2360 = vpop.f32.mrb[0].mxu0
    %v2361 = vadd.f32 %v285, %v2360
    %v2362 = vpop.f32.mrb[0].mxu0
    %v2363 = vpop.f32.mrb[0].mxu0
    %v2364 = vadd.f32 %v285, %v2363
    %v2365 = vpop.f32.mrb[0].mxu0
    %2366 = vmatprep.mubr.bf16.mxu0 0
    %2367 = vmatmul.mubr.bf16.gmra.mrb[0].mxu0 %v1316
    %v2368 = vpop.f32.mrb[0].mxu0
    %v2369 = vadd.f32 %v285, %v2368
    %v2370 = vpop.f32.mrb[0].mxu0
    %v2371 = vpop.f32.mrb[0].mxu0
    %v2372 = vadd.f32 %v285, %v2371
    %v2373 = vpop.f32.mrb[0].mxu0
    %2374 = vdwg.mxu0
    %v2375 = vmax.f32 %v1353, 0.0
    %v2376 = vmax.f32 %v1356, 0.0
    %v2377 = vmax.f32 %v1361, 0.0
    %v2378 = vmax.f32 %v1364, 0.0
    %v2379 = vmax.f32 %v1369, 0.0
    %v2380 = vmax.f32 %v1372, 0.0
    %v2381 = vmax.f32 %v1377, 0.0
    %v2382 = vmax.f32 %v1380, 0.0
    %v2383 = vmax.f32 %v1385, 0.0
    %v2384 = vmax.f32 %v1388, 0.0
    %v2385 = vmax.f32 %v1393, 0.0
    %v2386 = vmax.f32 %v1396, 0.0
    %v2387 = vmax.f32 %v1401, 0.0
    %v2388 = vmax.f32 %v1404, 0.0
    %v2389 = vmax.f32 %v1409, 0.0
    %v2390 = vmax.f32 %v1412, 0.0
    %v2391 = vmax.f32 %v1417, 0.0
    %v2392 = vmax.f32 %v1420, 0.0
    %v2393 = vmax.f32 %v1425, 0.0
    %v2394 = vmax.f32 %v1428, 0.0
    %v2395 = vmax.f32 %v1433, 0.0
    %v2396 = vmax.f32 %v1436, 0.0
    %v2397 = vmax.f32 %v1441, 0.0
    %v2398 = vmax.f32 %v1444, 0.0
    %v2399 = vmax.f32 %v1449, 0.0
    %v2400 = vmax.f32 %v1452, 0.0
    %v2401 = vmax.f32 %v1457, 0.0
    %v2402 = vmax.f32 %v1460, 0.0
    %v2403 = vmax.f32 %v1465, 0.0
    %v2404 = vmax.f32 %v1468, 0.0
    %v2405 = vmax.f32 %v1473, 0.0
    %v2406 = vmax.f32 %v1476, 0.0
    %v2407 = vmax.f32 %v1481, 0.0
    %v2408 = vmax.f32 %v1484, 0.0
    %v2409 = vmax.f32 %v1489, 0.0
    %v2410 = vmax.f32 %v1492, 0.0
    %v2411 = vmax.f32 %v1497, 0.0
    %v2412 = vmax.f32 %v1500, 0.0
    %v2413 = vmax.f32 %v1505, 0.0
    %v2414 = vmax.f32 %v1508, 0.0
    %v2415 = vmax.f32 %v1513, 0.0
    %v2416 = vmax.f32 %v1516, 0.0
    %v2417 = vmax.f32 %v1521, 0.0
    %v2418 = vmax.f32 %v1524, 0.0
    %v2419 = vmax.f32 %v1529, 0.0
    %v2420 = vmax.f32 %v1532, 0.0
    %v2421 = vmax.f32 %v1537, 0.0
    %v2422 = vmax.f32 %v1540, 0.0
    %v2423 = vmax.f32 %v1545, 0.0
    %v2424 = vmax.f32 %v1548, 0.0
    %v2425 = vmax.f32 %v1553, 0.0
    %v2426 = vmax.f32 %v1556, 0.0
    %v2427 = vmax.f32 %v1561, 0.0
    %v2428 = vmax.f32 %v1564, 0.0
    %v2429 = vmax.f32 %v1569, 0.0
    %v2430 = vmax.f32 %v1572, 0.0
    %v2431 = vmax.f32 %v1577, 0.0
    %v2432 = vmax.f32 %v1580, 0.0
    %v2433 = vmax.f32 %v1585, 0.0
    %v2434 = vmax.f32 %v1588, 0.0
    %v2435 = vmax.f32 %v1593, 0.0
    %v2436 = vmax.f32 %v1596, 0.0
    %v2437 = vmax.f32 %v1601, 0.0
    %v2438 = vmax.f32 %v1604, 0.0
    %v2439 = vmax.f32 %v1609, 0.0
    %v2440 = vmax.f32 %v1612, 0.0
    %v2441 = vmax.f32 %v1617, 0.0
    %v2442 = vmax.f32 %v1620, 0.0
    %v2443 = vmax.f32 %v1625, 0.0
    %v2444 = vmax.f32 %v1628, 0.0
    %v2445 = vmax.f32 %v1633, 0.0
    %v2446 = vmax.f32 %v1636, 0.0
    %v2447 = vmax.f32 %v1641, 0.0
    %v2448 = vmax.f32 %v1644, 0.0
    %v2449 = vmax.f32 %v1649, 0.0
    %v2450 = vmax.f32 %v1652, 0.0
    %v2451 = vmax.f32 %v1657, 0.0
    %v2452 = vmax.f32 %v1660, 0.0
    %v2453 = vmax.f32 %v1665, 0.0
    %v2454 = vmax.f32 %v1668, 0.0
    %v2455 = vmax.f32 %v1673, 0.0
    %v2456 = vmax.f32 %v1676, 0.0
    %v2457 = vmax.f32 %v1681, 0.0
    %v2458 = vmax.f32 %v1684, 0.0
    %v2459 = vmax.f32 %v1689, 0.0
    %v2460 = vmax.f32 %v1692, 0.0
    %v2461 = vmax.f32 %v1697, 0.0
    %v2462 = vmax.f32 %v1700, 0.0
    %v2463 = vmax.f32 %v1705, 0.0
    %v2464 = vmax.f32 %v1708, 0.0
    %v2465 = vmax.f32 %v1713, 0.0
    %v2466 = vmax.f32 %v1716, 0.0
    %v2467 = vmax.f32 %v1721, 0.0
    %v2468 = vmax.f32 %v1724, 0.0
    %v2469 = vmax.f32 %v1729, 0.0
    %v2470 = vmax.f32 %v1732, 0.0
    %v2471 = vmax.f32 %v1737, 0.0
    %v2472 = vmax.f32 %v1740, 0.0
    %v2473 = vmax.f32 %v1745, 0.0
    %v2474 = vmax.f32 %v1748, 0.0
    %v2475 = vmax.f32 %v1753, 0.0
    %v2476 = vmax.f32 %v1756, 0.0
    %v2477 = vmax.f32 %v1761, 0.0
    %v2478 = vmax.f32 %v1764, 0.0
    %v2479 = vmax.f32 %v1769, 0.0
    %v2480 = vmax.f32 %v1772, 0.0
    %v2481 = vmax.f32 %v1777, 0.0
    %v2482 = vmax.f32 %v1780, 0.0
    %v2483 = vmax.f32 %v1785, 0.0
    %v2484 = vmax.f32 %v1788, 0.0
    %v2485 = vmax.f32 %v1793, 0.0
    %v2486 = vmax.f32 %v1796, 0.0
    %v2487 = vmax.f32 %v1801, 0.0
    %v2488 = vmax.f32 %v1804, 0.0
    %v2489 = vmax.f32 %v1809, 0.0
    %v2490 = vmax.f32 %v1812, 0.0
    %v2491 = vmax.f32 %v1817, 0.0
    %v2492 = vmax.f32 %v1820, 0.0
    %v2493 = vmax.f32 %v1825, 0.0
    %v2494 = vmax.f32 %v1828, 0.0
    %v2495 = vmax.f32 %v1833, 0.0
    %v2496 = vmax.f32 %v1836, 0.0
    %v2497 = vmax.f32 %v1841, 0.0
    %v2498 = vmax.f32 %v1844, 0.0
    %v2499 = vmax.f32 %v1849, 0.0
    %v2500 = vmax.f32 %v1852, 0.0
    %v2501 = vmax.f32 %v1857, 0.0
    %v2502 = vmax.f32 %v1860, 0.0
    %v2503 = vmax.f32 %v1865, 0.0
    %v2504 = vmax.f32 %v1868, 0.0
    %v2505 = vmax.f32 %v1873, 0.0
    %v2506 = vmax.f32 %v1876, 0.0
    %v2507 = vmax.f32 %v1881, 0.0
    %v2508 = vmax.f32 %v1884, 0.0
    %v2509 = vmax.f32 %v1889, 0.0
    %v2510 = vmax.f32 %v1892, 0.0
    %v2511 = vmax.f32 %v1897, 0.0
    %v2512 = vmax.f32 %v1900, 0.0
    %v2513 = vmax.f32 %v1905, 0.0
    %v2514 = vmax.f32 %v1908, 0.0
    %v2515 = vmax.f32 %v1913, 0.0
    %v2516 = vmax.f32 %v1916, 0.0
    %v2517 = vmax.f32 %v1921, 0.0
    %v2518 = vmax.f32 %v1924, 0.0
    %v2519 = vmax.f32 %v1929, 0.0
    %v2520 = vmax.f32 %v1932, 0.0
    %v2521 = vmax.f32 %v1937, 0.0
    %v2522 = vmax.f32 %v1940, 0.0
    %v2523 = vmax.f32 %v1945, 0.0
    %v2524 = vmax.f32 %v1948, 0.0
    %v2525 = vmax.f32 %v1953, 0.0
    %v2526 = vmax.f32 %v1956, 0.0
    %v2527 = vmax.f32 %v1961, 0.0
    %v2528 = vmax.f32 %v1964, 0.0
    %v2529 = vmax.f32 %v1969, 0.0
    %v2530 = vmax.f32 %v1972, 0.0
    %v2531 = vmax.f32 %v1977, 0.0
    %v2532 = vmax.f32 %v1980, 0.0
    %v2533 = vmax.f32 %v1985, 0.0
    %v2534 = vmax.f32 %v1988, 0.0
    %v2535 = vmax.f32 %v1993, 0.0
    %v2536 = vmax.f32 %v1996, 0.0
    %v2537 = vmax.f32 %v2001, 0.0
    %v2538 = vmax.f32 %v2004, 0.0
    %v2539 = vmax.f32 %v2009, 0.0
    %v2540 = vmax.f32 %v2012, 0.0
    %v2541 = vmax.f32 %v2017, 0.0
    %v2542 = vmax.f32 %v2020, 0.0
    %v2543 = vmax.f32 %v2025, 0.0
    %v2544 = vmax.f32 %v2028, 0.0
    %v2545 = vmax.f32 %v2033, 0.0
    %v2546 = vmax.f32 %v2036, 0.0
    %v2547 = vmax.f32 %v2041, 0.0
    %v2548 = vmax.f32 %v2044, 0.0
    %v2549 = vmax.f32 %v2049, 0.0
    %v2550 = vmax.f32 %v2052, 0.0
    %v2551 = vmax.f32 %v2057, 0.0
    %v2552 = vmax.f32 %v2060, 0.0
    %v2553 = vmax.f32 %v2065, 0.0
    %v2554 = vmax.f32 %v2068, 0.0
    %v2555 = vmax.f32 %v2073, 0.0
    %v2556 = vmax.f32 %v2076, 0.0
    %v2557 = vmax.f32 %v2081, 0.0
    %v2558 = vmax.f32 %v2084, 0.0
    %v2559 = vmax.f32 %v2089, 0.0
    %v2560 = vmax.f32 %v2092, 0.0
    %v2561 = vmax.f32 %v2097, 0.0
    %v2562 = vmax.f32 %v2100, 0.0
    %v2563 = vmax.f32 %v2105, 0.0
    %v2564 = vmax.f32 %v2108, 0.0
    %v2565 = vmax.f32 %v2113, 0.0
    %v2566 = vmax.f32 %v2116, 0.0
    %v2567 = vmax.f32 %v2121, 0.0
    %v2568 = vmax.f32 %v2124, 0.0
    %v2569 = vmax.f32 %v2129, 0.0
    %v2570 = vmax.f32 %v2132, 0.0
    %v2571 = vmax.f32 %v2137, 0.0
    %v2572 = vmax.f32 %v2140, 0.0
    %v2573 = vmax.f32 %v2145, 0.0
    %v2574 = vmax.f32 %v2148, 0.0
    %v2575 = vmax.f32 %v2153, 0.0
    %v2576 = vmax.f32 %v2156, 0.0
    %v2577 = vmax.f32 %v2161, 0.0
    %v2578 = vmax.f32 %v2164, 0.0
    %v2579 = vmax.f32 %v2169, 0.0
    %v2580 = vmax.f32 %v2172, 0.0
    %v2581 = vmax.f32 %v2177, 0.0
    %v2582 = vmax.f32 %v2180, 0.0
    %v2583 = vmax.f32 %v2185, 0.0
    %v2584 = vmax.f32 %v2188, 0.0
    %v2585 = vmax.f32 %v2193, 0.0
    %v2586 = vmax.f32 %v2196, 0.0
    %v2587 = vmax.f32 %v2201, 0.0
    %v2588 = vmax.f32 %v2204, 0.0
    %v2589 = vmax.f32 %v2209, 0.0
    %v2590 = vmax.f32 %v2212, 0.0
    %v2591 = vmax.f32 %v2217, 0.0
    %v2592 = vmax.f32 %v2220, 0.0
    %v2593 = vmax.f32 %v2225, 0.0
    %v2594 = vmax.f32 %v2228, 0.0
    %v2595 = vmax.f32 %v2233, 0.0
    %v2596 = vmax.f32 %v2236, 0.0
    %v2597 = vmax.f32 %v2241, 0.0
    %v2598 = vmax.f32 %v2244, 0.0
    %v2599 = vmax.f32 %v2249, 0.0
    %v2600 = vmax.f32 %v2252, 0.0
    %v2601 = vmax.f32 %v2257, 0.0
    %v2602 = vmax.f32 %v2260, 0.0
    %v2603 = vmax.f32 %v2265, 0.0
    %v2604 = vmax.f32 %v2268, 0.0
    %v2605 = vmax.f32 %v2273, 0.0
    %v2606 = vmax.f32 %v2276, 0.0
    %v2607 = vmax.f32 %v2281, 0.0
    %v2608 = vmax.f32 %v2284, 0.0
    %v2609 = vmax.f32 %v2289, 0.0
    %v2610 = vmax.f32 %v2292, 0.0
    %v2611 = vmax.f32 %v2297, 0.0
    %v2612 = vmax.f32 %v2300, 0.0
    %v2613 = vmax.f32 %v2305, 0.0
    %v2614 = vmax.f32 %v2308, 0.0
    %v2615 = vmax.f32 %v2313, 0.0
    %v2616 = vmax.f32 %v2316, 0.0
    %v2617 = vmax.f32 %v2321, 0.0
    %v2618 = vmax.f32 %v2324, 0.0
    %v2619 = vmax.f32 %v2329, 0.0
    %v2620 = vmax.f32 %v2332, 0.0
    %v2621 = vmax.f32 %v2337, 0.0
    %v2622 = vmax.f32 %v2340, 0.0
    %v2623 = vmax.f32 %v2345, 0.0
    %v2624 = vmax.f32 %v2348, 0.0
    %v2625 = vmax.f32 %v2353, 0.0
    %v2626 = vmax.f32 %v2356, 0.0
    %v2627 = vmax.f32 %v2361, 0.0
    %v2628 = vmax.f32 %v2364, 0.0
    %v2629 = vmax.f32 %v2369, 0.0
    %v2630 = vmax.f32 %v2372, 0.0
    %v2631 = vadd.f32 %v2375, %v2376
    %v2632 = vadd.f32 %v2631, %v2377
    %v2633 = vadd.f32 %v2632, %v2378
    %v2634 = vadd.f32 %v2633, %v2379
    %v2635 = vadd.f32 %v2634, %v2380
    %v2636 = vadd.f32 %v2635, %v2381
    %v2637 = vadd.f32 %v2636, %v2382
    %v2638 = vadd.f32 %v2637, %v2383
    %v2639 = vadd.f32 %v2638, %v2384
    %v2640 = vadd.f32 %v2639, %v2385
    %v2641 = vadd.f32 %v2640, %v2386
    %v2642 = vadd.f32 %v2641, %v2387
    %v2643 = vadd.f32 %v2642, %v2388
    %v2644 = vadd.f32 %v2643, %v2389
    %v2645 = vadd.f32 %v2644, %v2390
    %v2646 = vadd.f32 %v2645, %v2391
    %v2647 = vadd.f32 %v2646, %v2392
    %v2648 = vadd.f32 %v2647, %v2393
    %v2649 = vadd.f32 %v2648, %v2394
    %v2650 = vadd.f32 %v2649, %v2395
    %v2651 = vadd.f32 %v2650, %v2396
    %v2652 = vadd.f32 %v2651, %v2397
    %v2653 = vadd.f32 %v2652, %v2398
    %v2654 = vadd.f32 %v2653, %v2399
    %v2655 = vadd.f32 %v2654, %v2400
    %v2656 = vadd.f32 %v2655, %v2401
    %v2657 = vadd.f32 %v2656, %v2402
    %v2658 = vadd.f32 %v2657, %v2403
    %v2659 = vadd.f32 %v2658, %v2404
    %v2660 = vadd.f32 %v2659, %v2405
    %v2661 = vadd.f32 %v2660, %v2406
    %v2662 = vrot.slane %v2661, 4
    %v2663 = vadd.f32 %v2661, %v2662
    %v2664 = vrot.slane %v2663, 2
    %v2665 = vadd.f32 %v2663, %v2664
    %v2666 = vrot.slane %v2665, 1
    %v2667 = vadd.f32 %v2665, %v2666
    %v2668 = vadd.f32 %v2407, %v2408
    %v2669 = vadd.f32 %v2668, %v2409
    %v2670 = vadd.f32 %v2669, %v2410
    %v2671 = vadd.f32 %v2670, %v2411
    %v2672 = vadd.f32 %v2671, %v2412
    %v2673 = vadd.f32 %v2672, %v2413
    %v2674 = vadd.f32 %v2673, %v2414
    %v2675 = vadd.f32 %v2674, %v2415
    %v2676 = vadd.f32 %v2675, %v2416
    %v2677 = vadd.f32 %v2676, %v2417
    %v2678 = vadd.f32 %v2677, %v2418
    %v2679 = vadd.f32 %v2678, %v2419
    %v2680 = vadd.f32 %v2679, %v2420
    %v2681 = vadd.f32 %v2680, %v2421
    %v2682 = vadd.f32 %v2681, %v2422
    %v2683 = vadd.f32 %v2682, %v2423
    %v2684 = vadd.f32 %v2683, %v2424
    %v2685 = vadd.f32 %v2684, %v2425
    %v2686 = vadd.f32 %v2685, %v2426
    %v2687 = vadd.f32 %v2686, %v2427
    %v2688 = vadd.f32 %v2687, %v2428
    %v2689 = vadd.f32 %v2688, %v2429
    %v2690 = vadd.f32 %v2689, %v2430
    %v2691 = vadd.f32 %v2690, %v2431
    %v2692 = vadd.f32 %v2691, %v2432
    %v2693 = vadd.f32 %v2692, %v2433
    %v2694 = vadd.f32 %v2693, %v2434
    %v2695 = vadd.f32 %v2694, %v2435
    %v2696 = vadd.f32 %v2695, %v2436
    %v2697 = vadd.f32 %v2696, %v2437
    %v2698 = vadd.f32 %v2697, %v2438
    %v2699 = vrot.slane %v2698, 4
    %v2700 = vadd.f32 %v2698, %v2699
    %v2701 = vrot.slane %v2700, 2
    %v2702 = vadd.f32 %v2700, %v2701
    %v2703 = vrot.slane %v2702, 1
    %v2704 = vadd.f32 %v2702, %v2703
    %v2705 = vadd.f32 %v2439, %v2440
    %v2706 = vadd.f32 %v2705, %v2441
    %v2707 = vadd.f32 %v2706, %v2442
    %v2708 = vadd.f32 %v2707, %v2443
    %v2709 = vadd.f32 %v2708, %v2444
    %v2710 = vadd.f32 %v2709, %v2445
    %v2711 = vadd.f32 %v2710, %v2446
    %v2712 = vadd.f32 %v2711, %v2447
    %v2713 = vadd.f32 %v2712, %v2448
    %v2714 = vadd.f32 %v2713, %v2449
    %v2715 = vadd.f32 %v2714, %v2450
    %v2716 = vadd.f32 %v2715, %v2451
    %v2717 = vadd.f32 %v2716, %v2452
    %v2718 = vadd.f32 %v2717, %v2453
    %v2719 = vadd.f32 %v2718, %v2454
    %v2720 = vadd.f32 %v2719, %v2455
    %v2721 = vadd.f32 %v2720, %v2456
    %v2722 = vadd.f32 %v2721, %v2457
    %v2723 = vadd.f32 %v2722, %v2458
    %v2724 = vadd.f32 %v2723, %v2459
    %v2725 = vadd.f32 %v2724, %v2460
    %v2726 = vadd.f32 %v2725, %v2461
    %v2727 = vadd.f32 %v2726, %v2462
    %v2728 = vadd.f32 %v2727, %v2463
    %v2729 = vadd.f32 %v2728, %v2464
    %v2730 = vadd.f32 %v2729, %v2465
    %v2731 = vadd.f32 %v2730, %v2466
    %v2732 = vadd.f32 %v2731, %v2467
    %v2733 = vadd.f32 %v2732, %v2468
    %v2734 = vadd.f32 %v2733, %v2469
    %v2735 = vadd.f32 %v2734, %v2470
    %v2736 = vrot.slane %v2735, 4
    %v2737 = vadd.f32 %v2735, %v2736
    %v2738 = vrot.slane %v2737, 2
    %v2739 = vadd.f32 %v2737, %v2738
    %v2740 = vrot.slane %v2739, 1
    %v2741 = vadd.f32 %v2739, %v2740
    %v2742 = vadd.f32 %v2471, %v2472
    %v2743 = vadd.f32 %v2742, %v2473
    %v2744 = vadd.f32 %v2743, %v2474
    %v2745 = vadd.f32 %v2744, %v2475
    %v2746 = vadd.f32 %v2745, %v2476
    %v2747 = vadd.f32 %v2746, %v2477
    %v2748 = vadd.f32 %v2747, %v2478
    %v2749 = vadd.f32 %v2748, %v2479
    %v2750 = vadd.f32 %v2749, %v2480
    %v2751 = vadd.f32 %v2750, %v2481
    %v2752 = vadd.f32 %v2751, %v2482
    %v2753 = vadd.f32 %v2752, %v2483
    %v2754 = vadd.f32 %v2753, %v2484
    %v2755 = vadd.f32 %v2754, %v2485
    %v2756 = vadd.f32 %v2755, %v2486
    %v2757 = vadd.f32 %v2756, %v2487
    %v2758 = vadd.f32 %v2757, %v2488
    %v2759 = vadd.f32 %v2758, %v2489
    %v2760 = vadd.f32 %v2759, %v2490
    %v2761 = vadd.f32 %v2760, %v2491
    %v2762 = vadd.f32 %v2761, %v2492
    %v2763 = vadd.f32 %v2762, %v2493
    %v2764 = vadd.f32 %v2763, %v2494
    %v2765 = vadd.f32 %v2764, %v2495
    %v2766 = vadd.f32 %v2765, %v2496
    %v2767 = vadd.f32 %v2766, %v2497
    %v2768 = vadd.f32 %v2767, %v2498
    %v2769 = vadd.f32 %v2768, %v2499
    %v2770 = vadd.f32 %v2769, %v2500
    %v2771 = vadd.f32 %v2770, %v2501
    %v2772 = vadd.f32 %v2771, %v2502
    %v2773 = vrot.slane %v2772, 4
    %v2774 = vadd.f32 %v2772, %v2773
    %v2775 = vrot.slane %v2774, 2
    %v2776 = vadd.f32 %v2774, %v2775
    %v2777 = vrot.slane %v2776, 1
    %v2778 = vadd.f32 %v2776, %v2777
    %v2779 = vadd.f32 %v2503, %v2504
    %v2780 = vadd.f32 %v2779, %v2505
    %v2781 = vadd.f32 %v2780, %v2506
    %v2782 = vadd.f32 %v2781, %v2507
    %v2783 = vadd.f32 %v2782, %v2508
    %v2784 = vadd.f32 %v2783, %v2509
    %v2785 = vadd.f32 %v2784, %v2510
    %v2786 = vadd.f32 %v2785, %v2511
    %v2787 = vadd.f32 %v2786, %v2512
    %v2788 = vadd.f32 %v2787, %v2513
    %v2789 = vadd.f32 %v2788, %v2514
    %v2790 = vadd.f32 %v2789, %v2515
    %v2791 = vadd.f32 %v2790, %v2516
    %v2792 = vadd.f32 %v2791, %v2517
    %v2793 = vadd.f32 %v2792, %v2518
    %v2794 = vadd.f32 %v2793, %v2519
    %v2795 = vadd.f32 %v2794, %v2520
    %v2796 = vadd.f32 %v2795, %v2521
    %v2797 = vadd.f32 %v2796, %v2522
    %v2798 = vadd.f32 %v2797, %v2523
    %v2799 = vadd.f32 %v2798, %v2524
    %v2800 = vadd.f32 %v2799, %v2525
    %v2801 = vadd.f32 %v2800, %v2526
    %v2802 = vadd.f32 %v2801, %v2527
    %v2803 = vadd.f32 %v2802, %v2528
    %v2804 = vadd.f32 %v2803, %v2529
    %v2805 = vadd.f32 %v2804, %v2530
    %v2806 = vadd.f32 %v2805, %v2531
    %v2807 = vadd.f32 %v2806, %v2532
    %v2808 = vadd.f32 %v2807, %v2533
    %v2809 = vadd.f32 %v2808, %v2534
    %v2810 = vrot.slane %v2809, 4
    %v2811 = vadd.f32 %v2809, %v2810
    %v2812 = vrot.slane %v2811, 2
    %v2813 = vadd.f32 %v2811, %v2812
    %v2814 = vrot.slane %v2813, 1
    %v2815 = vadd.f32 %v2813, %v2814
    %v2816 = vadd.f32 %v2535, %v2536
    %v2817 = vadd.f32 %v2816, %v2537
    %v2818 = vadd.f32 %v2817, %v2538
    %v2819 = vadd.f32 %v2818, %v2539
    %v2820 = vadd.f32 %v2819, %v2540
    %v2821 = vadd.f32 %v2820, %v2541
    %v2822 = vadd.f32 %v2821, %v2542
    %v2823 = vadd.f32 %v2822, %v2543
    %v2824 = vadd.f32 %v2823, %v2544
    %v2825 = vadd.f32 %v2824, %v2545
    %v2826 = vadd.f32 %v2825, %v2546
    %v2827 = vadd.f32 %v2826, %v2547
    %v2828 = vadd.f32 %v2827, %v2548
    %v2829 = vadd.f32 %v2828, %v2549
    %v2830 = vadd.f32 %v2829, %v2550
    %v2831 = vadd.f32 %v2830, %v2551
    %v2832 = vadd.f32 %v2831, %v2552
    %v2833 = vadd.f32 %v2832, %v2553
    %v2834 = vadd.f32 %v2833, %v2554
    %v2835 = vadd.f32 %v2834, %v2555
    %v2836 = vadd.f32 %v2835, %v2556
    %v2837 = vadd.f32 %v2836, %v2557
    %v2838 = vadd.f32 %v2837, %v2558
    %v2839 = vadd.f32 %v2838, %v2559
    %v2840 = vadd.f32 %v2839, %v2560
    %v2841 = vadd.f32 %v2840, %v2561
    %v2842 = vadd.f32 %v2841, %v2562
    %v2843 = vadd.f32 %v2842, %v2563
    %v2844 = vadd.f32 %v2843, %v2564
    %v2845 = vadd.f32 %v2844, %v2565
    %v2846 = vadd.f32 %v2845, %v2566
    %v2847 = vrot.slane %v2846, 4
    %v2848 = vadd.f32 %v2846, %v2847
    %v2849 = vrot.slane %v2848, 2
    %v2850 = vadd.f32 %v2848, %v2849
    %v2851 = vrot.slane %v2850, 1
    %v2852 = vadd.f32 %v2850, %v2851
    %v2853 = vadd.f32 %v2567, %v2568
    %v2854 = vadd.f32 %v2853, %v2569
    %v2855 = vadd.f32 %v2854, %v2570
    %v2856 = vadd.f32 %v2855, %v2571
    %v2857 = vadd.f32 %v2856, %v2572
    %v2858 = vadd.f32 %v2857, %v2573
    %v2859 = vadd.f32 %v2858, %v2574
    %v2860 = vadd.f32 %v2859, %v2575
    %v2861 = vadd.f32 %v2860, %v2576
    %v2862 = vadd.f32 %v2861, %v2577
    %v2863 = vadd.f32 %v2862, %v2578
    %v2864 = vadd.f32 %v2863, %v2579
    %v2865 = vadd.f32 %v2864, %v2580
    %v2866 = vadd.f32 %v2865, %v2581
    %v2867 = vadd.f32 %v2866, %v2582
    %v2868 = vadd.f32 %v2867, %v2583
    %v2869 = vadd.f32 %v2868, %v2584
    %v2870 = vadd.f32 %v2869, %v2585
    %v2871 = vadd.f32 %v2870, %v2586
    %v2872 = vadd.f32 %v2871, %v2587
    %v2873 = vadd.f32 %v2872, %v2588
    %v2874 = vadd.f32 %v2873, %v2589
    %v2875 = vadd.f32 %v2874, %v2590
    %v2876 = vadd.f32 %v2875, %v2591
    %v2877 = vadd.f32 %v2876, %v2592
    %v2878 = vadd.f32 %v2877, %v2593
    %v2879 = vadd.f32 %v2878, %v2594
    %v2880 = vadd.f32 %v2879, %v2595
    %v2881 = vadd.f32 %v2880, %v2596
    %v2882 = vadd.f32 %v2881, %v2597
    %v2883 = vadd.f32 %v2882, %v2598
    %v2884 = vrot.slane %v2883, 4
    %v2885 = vadd.f32 %v2883, %v2884
    %v2886 = vrot.slane %v2885, 2
    %v2887 = vadd.f32 %v2885, %v2886
    %v2888 = vrot.slane %v2887, 1
    %v2889 = vadd.f32 %v2887, %v2888
    %v2890 = vadd.f32 %v2599, %v2600
    %v2891 = vadd.f32 %v2890, %v2601
    %v2892 = vadd.f32 %v2891, %v2602
    %v2893 = vadd.f32 %v2892, %v2603
    %v2894 = vadd.f32 %v2893, %v2604
    %v2895 = vadd.f32 %v2894, %v2605
    %v2896 = vadd.f32 %v2895, %v2606
    %v2897 = vadd.f32 %v2896, %v2607
    %v2898 = vadd.f32 %v2897, %v2608
    %v2899 = vadd.f32 %v2898, %v2609
    %v2900 = vadd.f32 %v2899, %v2610
    %v2901 = vadd.f32 %v2900, %v2611
    %v2902 = vadd.f32 %v2901, %v2612
    %v2903 = vadd.f32 %v2902, %v2613
    %v2904 = vadd.f32 %v2903, %v2614
    %v2905 = vadd.f32 %v2904, %v2615
    %v2906 = vadd.f32 %v2905, %v2616
    %v2907 = vadd.f32 %v2906, %v2617
    %v2908 = vadd.f32 %v2907, %v2618
    %v2909 = vadd.f32 %v2908, %v2619
    %v2910 = vadd.f32 %v2909, %v2620
    %v2911 = vadd.f32 %v2910, %v2621
    %v2912 = vadd.f32 %v2911, %v2622
    %v2913 = vadd.f32 %v2912, %v2623
    %v2914 = vadd.f32 %v2913, %v2624
    %v2915 = vadd.f32 %v2914, %v2625
    %v2916 = vadd.f32 %v2915, %v2626
    %v2917 = vadd.f32 %v2916, %v2627
    %v2918 = vadd.f32 %v2917, %v2628
    %v2919 = vadd.f32 %v2918, %v2629
    %v2920 = vadd.f32 %v2919, %v2630
    %v2921 = vrot.slane %v2920, 4
    %v2922 = vadd.f32 %v2920, %v2921
    %v2923 = vrot.slane %v2922, 2
    %v2924 = vadd.f32 %v2922, %v2923
    %v2925 = vrot.slane %v2924, 1
    %v2926 = vadd.f32 %v2924, %v2925
    %p2927 = scmp.eq.s32.totalorder 0, 0
    // Predicated region
    $region22: #{tpu_custom_call.1} parent=1 // pred_check
      %p2928 = pneg %p2927
    $region23: #{tpu_custom_call.1} parent=1 // pred_check_branch
      %2930 = sbr.rel (%p2928) target = $region25
    $region24: #{tpu_custom_call.1} parent=1 // pred_region
      %vm2939 = vcmask 1041409
      %v2940 = vsel %vm2939, %v2704, %v2667
      %vm2941 = vcmask 1042434
      %v2942 = vsel %vm2941, %v2741, %v2940
      %vm2943 = vcmask 1043459
      %v2944 = vsel %vm2943, %v2778, %v2942
      %vm2945 = vcmask 1044484
      %v2946 = vsel %vm2945, %v2815, %v2944
      %vm2947 = vcmask 1045509
      %v2948 = vsel %vm2947, %v2852, %v2946
      %vm2949 = vcmask 1046534
      %v2950 = vsel %vm2949, %v2889, %v2948
      %vm2951 = vcmask 1047559
      %v2952 = vsel %vm2951, %v2926, %v2950
      %2954 = vst [vmem:[#allocation2] sm:$0xff] %v2952
    $region25: #{tpu_custom_call.1} parent=1 // pred_fallthru
      _
    %p2955 = scmp.ne.s32.totalorder 0, 0
    // Predicated region
    $region26: #{tpu_custom_call.1} parent=1 // pred_check
      %p2956 = pneg %p2955
    $region27: #{tpu_custom_call.1} parent=1 // pred_check_branch
      %2958 = sbr.rel (%p2956) target = $region29
    $region28: #{tpu_custom_call.1} parent=1 // pred_region
      %v2959 = vld [vmem:[#allocation2] sm:$0xff]
      %vm2968 = vcmask 1041409
      %v2969 = vsel %vm2968, %v2704, %v2667
      %vm2970 = vcmask 1042434
      %v2971 = vsel %vm2970, %v2741, %v2969
      %vm2972 = vcmask 1043459
      %v2973 = vsel %vm2972, %v2778, %v2971
      %vm2974 = vcmask 1044484
      %v2975 = vsel %vm2974, %v2815, %v2973
      %vm2976 = vcmask 1045509
      %v2977 = vsel %vm2976, %v2852, %v2975
      %vm2978 = vcmask 1046534
      %v2979 = vsel %vm2978, %v2889, %v2977
      %vm2980 = vcmask 1047559
      %v2981 = vsel %vm2980, %v2926, %v2979
      %v2983 = vadd.f32 %v2959, %v2981
      %2984 = vst [vmem:[#allocation2] sm:$0xff] %v2983
    $region29: #{tpu_custom_call.1} parent=1 // pred_fallthru
      _
    // Predicated region
    $region30: #{tpu_custom_call.1} parent=1 // pred_check
      %p2985 = pneg %p2927
    $region31: #{tpu_custom_call.1} parent=1 // pred_check_branch
      %2987 = sbr.rel (%p2985) target = $region33
    $region32: #{tpu_custom_call.1} parent=1 // pred_region
      %v2988 = vld [vmem:[#allocation2] sm:$0xff]
      %v2989 = vmul.f32 %v2988, 0.00390625
      %v2990 = vmul.f32 %v2989, %v2989
      %2991 = vadd.xlane.f32.xlu0 %v2990
      %v2992 = vpop.xlane.xlu0 %2991
      %v2993 = vrsqrt.pop %v2992
      %v2994 = vmul.f32 %v2989, %v2993
      %v2995 = vpack.c.bf16 %v2994, %v2994
      %v2996 = vld [vmem:[%s3] sm:$0xf]
      %v2997 = vld [vmem:[%s3 + $0x4] sm:$0xf]
      %v2998 = vld [vmem:[%s3 + $0x8] sm:$0xf]
      %v2999 = vld [vmem:[%s3 + $0xc] sm:$0xf]
      %v3000 = vld [vmem:[%s3 + $0x10] sm:$0xf]
      %v3001 = vld [vmem:[%s3 + $0x14] sm:$0xf]
      %v3002 = vld [vmem:[%s3 + $0x18] sm:$0xf]
      %v3003 = vld [vmem:[%s3 + $0x1c] sm:$0xf]
      %v3004 = vld [vmem:[%s3 + $0x20] sm:$0xf]
      %v3005 = vld [vmem:[%s3 + $0x24] sm:$0xf]
      %v3006 = vld [vmem:[%s3 + $0x28] sm:$0xf]
      %v3007 = vld [vmem:[%s3 + $0x2c] sm:$0xf]
      %v3008 = vld [vmem:[%s3 + $0x30] sm:$0xf]
      %v3009 = vld [vmem:[%s3 + $0x34] sm:$0xf]
      %v3010 = vld [vmem:[%s3 + $0x38] sm:$0xf]
      %v3011 = vld [vmem:[%s3 + $0x3c] sm:$0xf]
      %v3012 = vld [vmem:[%s4] sm:$0x1]
      %v3014 = vlaneseq
      %v3015 = vshrl.u32 %v3014, 7
      %v3016 = vsub.s32 0, %v3015
      %v3017 = vrot.slane %v3012, %v3016
      %v3035 = vunpack.c.l.b16 %v2996
      %v3036 = vunpack.c.l.b16 %v2997
      %v3037 = vunpack.c.l.b16 %v2998
      %v3038 = vunpack.c.l.b16 %v2999
      %v3039 = vunpack.c.l.b16 %v3000
      %v3040 = vunpack.c.l.b16 %v3001
      %v3041 = vunpack.c.l.b16 %v3002
      %v3042 = vunpack.c.l.b16 %v3003
      %v3043 = vunpack.c.l.b16 %v3004
      %v3044 = vunpack.c.l.b16 %v3005
      %v3045 = vunpack.c.l.b16 %v3006
      %v3046 = vunpack.c.l.b16 %v3007
      %v3047 = vunpack.c.l.b16 %v3008
      %v3048 = vunpack.c.l.b16 %v3009
      %v3049 = vunpack.c.l.b16 %v3010
      %v3050 = vunpack.c.l.b16 %v3011
      %v3051 = vpack.c.b16 %v3036, %v3035
      %v3052 = vpack.c.b16 %v3038, %v3037
      %v3053 = vpack.c.b16 %v3040, %v3039
      %v3054 = vpack.c.b16 %v3042, %v3041
      %v3055 = vpack.c.b16 %v3044, %v3043
      %v3056 = vpack.c.b16 %v3046, %v3045
      %v3057 = vpack.c.b16 %v3048, %v3047
      %v3058 = vpack.c.b16 %v3050, %v3049
      %3067 = vmatprep.subr.bf16.mxu0 0
      %3068 = vmatpush1.bf16.msra.mxu0 %v3051
      %3069 = vmatprep.subr.bf16.mxu0 0
      %3070 = vmatpush1.bf16.msra.mxu0 %v3052
      %3071 = vmatprep.subr.bf16.mxu0 0
      %3072 = vmatpush1.bf16.msra.mxu0 %v3053
      %3073 = vmatprep.subr.bf16.mxu0 0
      %3074 = vmatpush1.bf16.msra.mxu0 %v3054
      %3075 = vmatprep.subr.bf16.mxu0 0
      %3076 = vmatpush1.bf16.msra.mxu0 %v3055
      %3077 = vmatprep.subr.bf16.mxu0 0
      %3078 = vmatpush1.bf16.msra.mxu0 %v3056
      %3079 = vmatprep.subr.bf16.mxu0 0
      %3080 = vmatpush1.bf16.msra.mxu0 %v3057
      %3081 = vmatprep.subr.bf16.mxu0 0
      %3082 = vmatpush1.bf16.msra.mxu0 %v3058
      %3083 = vmatprep.subr.bf16.mxu0 0
      %3084 = vmatpush1.bf16.msra.mxu0 0
      %3085 = vmatprep.subr.bf16.mxu0 0
      %3086 = vmatpush1.bf16.msra.mxu0 0
      %3087 = vmatprep.subr.bf16.mxu0 0
      %3088 = vmatpush1.bf16.msra.mxu0 0
      %3089 = vmatprep.subr.bf16.mxu0 0
      %3090 = vmatpush1.bf16.msra.mxu0 0
      %3091 = vmatprep.subr.bf16.mxu0 0
      %3092 = vmatpush1.bf16.msra.mxu0 0
      %3093 = vmatprep.subr.bf16.mxu0 0
      %3094 = vmatpush1.bf16.msra.mxu0 0
      %3095 = vmatprep.subr.bf16.mxu0 0
      %3096 = vmatpush1.bf16.msra.mxu0 0
      %3097 = vmatprep.subr.bf16.mxu0 0
      %3098 = vmatpush1.bf16.msra.mxu0 0
      %3099 = vmatprep.mubr.bf16.mxu0 0
      %3100 = vmatmul.mubr.bf16.gmra.mrb[0].mxu0 %v2995
      %v3101 = vpop.f32.mrb[0].mxu0
      %v3102 = vadd.f32 %v3017, %v3101
      %v3103 = vpop.f32.mrb[0].mxu0
      %v3104 = vpop.f32.mrb[0].mxu0
      %v3105 = vpop.f32.mrb[0].mxu0
      %3106 = vdwg.mxu0
      %v3107 = vmul.f32 %v3102, %v3102
      %3108 = vadd.xlane.f32.xlu0 %v3107
      %v3109 = vpop.xlane.xlu0 %3108
      %v3110 = vrsqrt.pop %v3109
      %v3111 = vmul.f32 %v3102, %v3110
      %3112 = vst [vmem:[#allocation3] sm:$0xff] %v3111
    $region33: #{tpu_custom_call.1} parent=1 // pred_fallthru
      _
    // Predicated region
    $region34: #{tpu_custom_call.1} parent=1 // pred_check
      _
    $region35: #{tpu_custom_call.1} parent=1 // pred_check_branch
      %3114 = sbr.rel (0) target = $region37
    $region36: #{tpu_custom_call.1} parent=1 // pred_region
      %s3116 = ssub.s32 128, 128
      %3117 = vsyncadd [#allocation4], %s3116
      %s3119 = sshll.u32 [#allocation3], 4
      %s3120 = int_to_ptr.vmem [resolvable:$true] %s3119
      %3122 = dma.vmem_to_hbm [thread:$0]  %s3120, 128, %s5, [#allocation4]
    $region37: #{tpu_custom_call.1} parent=1 // pred_fallthru
      _
    // Predicated region
    $region38: #{tpu_custom_call.1} parent=1 // pred_check
      _
    $region39: #{tpu_custom_call.1} parent=1 // pred_check_branch
      %3124 = sbr.rel (0) target = $region41
    $region40: #{tpu_custom_call.1} parent=1 // pred_region
      %3125 = dma.done [#allocation4], 128
    $region41: #{tpu_custom_call.1} parent=1 // pred_fallthru
      _
    %3126 = vsyncpa [#allocation4], 1

</llo_original>
